<compile_context>
chip_gen: v7x
topology: tpu7x:2x2x1
jax: 0.10.0
libtpu: 0.0.40
codegen_flags: <defaults>
</compile_context>

<pallas_src>
import functools
import math

import jax
import jax.numpy as jnp
from jax.experimental import pallas as pl
from jax.experimental.pallas import tpu as pltpu


def convgru_kernel(h_ref, x_ref, wzrh_ref, wqh_ref, wx_ref, b_ref, o_ref, *,
                   hidden_dim):
    H = hidden_dim
    h = h_ref[...]                                   # (H, Lt)  compute dtype
    x = x_ref[...]                                   # (D, Lt)

    # x-side contraction for all three gates (independent of r), issued before
    # the gate chain.  Rows [0:2H] -> z|r, rows [2H:3H] -> q.  Bias added once.
    gx = jnp.dot(wx_ref[...], x, preferred_element_type=jnp.float32)
    gx = gx + b_ref[...]                             # (3H, Lt) f32

    # Fused z/r gates: h-side contraction (K = H) + precomputed x-side part.
    zr = jnp.dot(wzrh_ref[...], h, preferred_element_type=jnp.float32) + gx[:2 * H, :]
    zr = jax.nn.sigmoid(zr)                          # (2H, Lt) f32
    z = zr[:H, :]
    r = zr[H:, :]

    h32 = h.astype(jnp.float32)
    rh = (r * h32).astype(h.dtype)                   # back to MXU input dtype
    q = jnp.tanh(
        jnp.dot(wqh_ref[...], rh, preferred_element_type=jnp.float32)
        + gx[2 * H:, :])                             # (H, Lt) f32

    # h_new = (1 - z) * h + z * q
    o_ref[...] = ((1.0 - z) * h32 + z * q).astype(o_ref.dtype)


def _pick_lane_tile(l_pad, batch, cap=2048):
    """Largest multiple-of-128 divisor of l_pad that is <= cap.  If the whole grid
    would collapse to one program, shrink so >= 2 parallel steps exist (v7x 2-TC)."""
    n = l_pad // 128
    dmax = max(1, cap // 128)
    divs = [d for d in range(1, min(n, dmax) + 1) if n % d == 0]
    best = divs[-1]
    if batch * (n // best) < 2:
        smaller = [d for d in divs if n // d >= 2]
        if smaller:
            best = smaller[-1]
    return 128 * best


def convgru_pallas(h_ncl, x_ncl, params, *, compute_dtype=jnp.bfloat16,
                   lane_tile=None, lane_tile_cap=2048, in_place=False):
    """h_ncl: (B, H, L), x_ncl: (B, D, L). Returns (B, H, L) in compute_dtype."""
    B, H, L = h_ncl.shape
    _, D, _ = x_ncl.shape
    w_zr_h, w_q_h, w_x, b = params
    assert w_zr_h.shape == (2 * H, H) and w_q_h.shape == (H, H)
    assert w_x.shape == (3 * H, D) and b.shape == (3 * H, 1)

    # bf16 by default: matmul inputs in compute dtype, bias/gate math in f32.
    h_c = h_ncl.astype(compute_dtype)
    x_c = x_ncl.astype(compute_dtype)
    w_zr_h = w_zr_h.astype(compute_dtype)
    w_q_h = w_q_h.astype(compute_dtype)
    w_x = w_x.astype(compute_dtype)
    b = b.astype(jnp.float32)

    # Pad only to the next multiple of 128 (lane width) — never to lane_tile.
    L_pad = ((L + 127) // 128) * 128
    if L_pad != L:
        pad = [(0, 0), (0, 0), (0, L_pad - L)]
        h_c = jnp.pad(h_c, pad)
        x_c = jnp.pad(x_c, pad)

    if lane_tile is None:
        lane_tile = _pick_lane_tile(L_pad, B, lane_tile_cap)
    assert lane_tile % 128 == 0 and L_pad % lane_tile == 0

    grid = (B, L_pad // lane_tile)

    h_spec = pl.BlockSpec((None, H, lane_tile), lambda bb, ll: (bb, 0, ll))
    x_spec = pl.BlockSpec((None, D, lane_tile), lambda bb, ll: (bb, 0, ll))
    wzrh_spec = pl.BlockSpec((2 * H, H), lambda bb, ll: (0, 0))
    wqh_spec = pl.BlockSpec((H, H), lambda bb, ll: (0, 0))
    wx_spec = pl.BlockSpec((3 * H, D), lambda bb, ll: (0, 0))
    b_spec = pl.BlockSpec((3 * H, 1), lambda bb, ll: (0, 0))

    # In-place recurrent update: h_new overwrites (the cast copy of) h in HBM.
    aliases = {0: 0} if (in_place and L_pad == L) else {}

    out = pl.pallas_call(
        functools.partial(convgru_kernel, hidden_dim=H),
        out_shape=jax.ShapeDtypeStruct((B, H, L_pad), compute_dtype),
        grid_spec=pltpu.PrefetchScalarGridSpec(
            num_scalar_prefetch=0,
            grid=grid,
            in_specs=[h_spec, x_spec, wzrh_spec, wqh_spec, wx_spec, b_spec],
            out_specs=h_spec,
        ),
        input_output_aliases=aliases,
        compiler_params=pltpu.CompilerParams(
            dimension_semantics=("parallel", "parallel"),
            vmem_limit_bytes=48 * 1024 * 1024),
    )(h_c, x_c, w_zr_h, w_q_h, w_x, b)

    if L_pad != L:
        out = out[:, :, :L]
    return out


def make_params(key, input_dim, hidden_dim, dtype=jnp.float32):
    """PyTorch-style Conv1d(k=1) weights for convz/convr/convq, pre-split so the
    kernel never concatenates:
      w_zr_h : (2H, H)  h-side weights of z and r (rows 0:H = z, H:2H = r)
      w_q_h  : (H, H)   h-side weights of q
      w_x    : (3H, D)  x-side weights of z, r, q stacked (x contracted once)
      b      : (3H, 1)  biases of z, r, q stacked
    """
    H, D = hidden_dim, input_dim
    c_in = H + D
    keys = jax.random.split(key, 6)
    bound = 1.0 / math.sqrt(c_in)       # PyTorch default Conv1d init bound

    def conv(kw, kb):
        w = jax.random.uniform(kw, (H, c_in), dtype, -bound, bound)
        bvec = jax.random.uniform(kb, (H,), dtype, -bound, bound)
        return w, bvec

    wz, bz = conv(keys[0], keys[1])
    wr, br = conv(keys[2], keys[3])
    wq, bq = conv(keys[4], keys[5])

    # PyTorch cat([h, x]) layout: columns 0:H multiply h, columns H:H+D multiply x.
    w_zr_h = jnp.concatenate([wz[:, :H], wr[:, :H]], axis=0)           # (2H, H)
    w_q_h = wq[:, :H]                                                  # (H, H)
    w_x = jnp.concatenate([wz[:, H:], wr[:, H:], wq[:, H:]], axis=0)   # (3H, D)
    b = jnp.concatenate([bz, br, bq], axis=0)[:, None]                 # (3H, 1)
    return w_zr_h, w_q_h, w_x, b


def convgru_reference(h_ncl, x_ncl, params):
    """Pure-JAX reference mirroring the PyTorch forward (for verification)."""
    w_zr_h, w_q_h, w_x, b = params
    H = h_ncl.shape[1]
    gx = jnp.einsum('oc,bcl->bol', w_x, x_ncl) + b[None]
    zr = jax.nn.sigmoid(jnp.einsum('oc,bcl->bol', w_zr_h, h_ncl) + gx[:, :2 * H])
    z, r = zr[:, :H], zr[:, H:]
    q = jnp.tanh(jnp.einsum('oc,bcl->bol', w_q_h, r * h_ncl) + gx[:, 2 * H:])
    return (1.0 - z) * h_ncl + z * q


if __name__ == "__main__":
    # Module defaults: ConvGRU(input_dim=64, hidden_dim=128). Small NCL inputs.
    B, L = 2, 200
    INPUT_DIM, HIDDEN_DIM = 64, 128

    key = jax.random.PRNGKey(0)
    k_h, k_x, k_p = jax.random.split(key, 3)
    params = make_params(k_p, INPUT_DIM, HIDDEN_DIM)

    # --- 1) f32 path, ragged L (pads 200 -> 256; lane_tile=256; grid (2, 1)) ---
    h0 = jax.random.normal(k_h, (B, HIDDEN_DIM, L), jnp.float32)
    x0 = jax.random.normal(k_x, (B, INPUT_DIM, L), jnp.float32)
    run_f32 = jax.jit(
        lambda h, x: convgru_pallas(h, x, params, compute_dtype=jnp.float32))
    out_f32 = jax.block_until_ready(run_f32(h0, x0))
    ref = convgru_reference(h0, x0, params)
    assert out_f32.shape == (B, HIDDEN_DIM, L)
    assert jnp.allclose(out_f32, ref, atol=2e-4, rtol=2e-4), "f32 mismatch vs reference"

    # --- 2) default bf16 path, L % 128 == 0 (no pad), in-place aliasing ---
    L2 = 256
    h1 = jax.random.normal(k_h, (B, HIDDEN_DIM, L2), jnp.float32)
    x1 = jax.random.normal(k_x, (B, INPUT_DIM, L2), jnp.float32)
    run_bf16 = jax.jit(lambda h, x: convgru_pallas(h, x, params, in_place=True))
    out_bf16 = jax.block_until_ready(run_bf16(h1, x1))
    assert out_bf16.shape == (B, HIDDEN_DIM, L2) and out_bf16.dtype == jnp.bfloat16
    # Mixed-precision tolerance: reference on bf16-rounded inputs/weights.
    to_bf = lambda a: a.astype(jnp.bfloat16).astype(jnp.float32)
    ref_bf = convgru_reference(to_bf(h1), to_bf(x1),
                               jax.tree_util.tree_map(to_bf, params))
    assert jnp.allclose(out_bf16.astype(jnp.float32), ref_bf, atol=3e-2, rtol=3e-2), \
        "bf16 mismatch vs reference"

    print("KERNEL_OK")
</pallas_src>

<mosaic_0001>
module attributes {stable_mosaic.version = 11 : i64} {
  func.func @convgru_kernel(%arg0: i32, %arg1: i32, %arg2: memref<1x128x256xf32, #tpu.memory_space<vmem>>, %arg3: memref<1x64x256xf32, #tpu.memory_space<vmem>>, %arg4: memref<256x128xf32, #tpu.memory_space<vmem>>, %arg5: memref<128x128xf32, #tpu.memory_space<vmem>>, %arg6: memref<384x64xf32, #tpu.memory_space<vmem>>, %arg7: memref<384x1xf32, #tpu.memory_space<vmem>>, %arg8: memref<1x128x256xf32, #tpu.memory_space<vmem>>) attributes {dimension_semantics = [#tpu.dimension_semantics<parallel>, #tpu.dimension_semantics<parallel>], iteration_bounds = array<i64: 2, 1>, scalar_prefetch = 0 : i64, scratch_operands = 0 : i64, tpu.core_type = #tpu.core_type<tc>, window_params = [{transform_indices = @transform_0, window_bounds = array<i64: 1, 128, 256>}, {transform_indices = @transform_1, window_bounds = array<i64: 1, 64, 256>}, {pipeline_mode = #tpu.pipeline_mode<synchronous>, transform_indices = @transform_2, window_bounds = array<i64: 256, 128>}, {pipeline_mode = #tpu.pipeline_mode<synchronous>, transform_indices = @transform_3, window_bounds = array<i64: 128, 128>}, {pipeline_mode = #tpu.pipeline_mode<synchronous>, transform_indices = @transform_4, window_bounds = array<i64: 384, 64>}, {pipeline_mode = #tpu.pipeline_mode<synchronous>, transform_indices = @transform_5, window_bounds = array<i64: 384, 1>}, {transform_indices = @transform_6, window_bounds = array<i64: 1, 128, 256>}]} {
    %c0 = arith.constant 0 : index
    %c0_0 = arith.constant 0 : index
    %c0_1 = arith.constant 0 : index
    %0 = vector.load %arg2[%c0, %c0_0, %c0_1] : memref<1x128x256xf32, #tpu.memory_space<vmem>>, vector<1x128x256xf32>
    %1 = vector.shape_cast %0 : vector<1x128x256xf32> to vector<128x256xf32>
    %c0_2 = arith.constant 0 : index
    %c0_3 = arith.constant 0 : index
    %c0_4 = arith.constant 0 : index
    %2 = vector.load %arg3[%c0_2, %c0_3, %c0_4] : memref<1x64x256xf32, #tpu.memory_space<vmem>>, vector<1x64x256xf32>
    %3 = vector.shape_cast %2 : vector<1x64x256xf32> to vector<64x256xf32>
    %c0_5 = arith.constant 0 : index
    %c0_6 = arith.constant 0 : index
    %4 = vector.load %arg6[%c0_5, %c0_6] : memref<384x64xf32, #tpu.memory_space<vmem>>, vector<384x64xf32>
    %cst = arith.constant dense<0.000000e+00> : vector<384x256xf32>
    %5 = tpu.matmul %4, %3, %cst {dimension_numbers = #tpu.dot_dimension_numbers<[1], [0], [0], [1], [0, 0, 1, 1], [], []>} : vector<384x64xf32>, vector<64x256xf32>, vector<384x256xf32> -> vector<384x256xf32>
    %c0_7 = arith.constant 0 : index
    %c0_8 = arith.constant 0 : index
    %6 = vector.load %arg7[%c0_7, %c0_8] : memref<384x1xf32, #tpu.memory_space<vmem>>, vector<384x1xf32>
    %7 = vector.broadcast %6 : vector<384x1xf32> to vector<384x256xf32>
    %8 = arith.addf %5, %7 : vector<384x256xf32>
    %c0_9 = arith.constant 0 : index
    %c0_10 = arith.constant 0 : index
    %9 = vector.load %arg4[%c0_9, %c0_10] : memref<256x128xf32, #tpu.memory_space<vmem>>, vector<256x128xf32>
    %cst_11 = arith.constant dense<0.000000e+00> : vector<256x256xf32>
    %10 = tpu.matmul %9, %1, %cst_11 {dimension_numbers = #tpu.dot_dimension_numbers<[1], [0], [0], [1], [0, 0, 1, 1], [], []>} : vector<256x128xf32>, vector<128x256xf32>, vector<256x256xf32> -> vector<256x256xf32>
    %11 = vector.extract_strided_slice %8 {offsets = [0, 0], sizes = [256, 256], strides = [1, 1]} : vector<384x256xf32> to vector<256x256xf32>
    %12 = arith.addf %10, %11 : vector<256x256xf32>
    %13 = arith.negf %12 : vector<256x256xf32>
    %14 = math.exp %13 : vector<256x256xf32>
    %cst_12 = arith.constant 1.000000e+00 : f32
    %15 = vector.broadcast %cst_12 : f32 to vector<256x256xf32>
    %16 = arith.addf %15, %14 : vector<256x256xf32>
    %17 = arith.divf %15, %16 : vector<256x256xf32>
    %18 = vector.extract_strided_slice %17 {offsets = [0, 0], sizes = [128, 256], strides = [1, 1]} : vector<256x256xf32> to vector<128x256xf32>
    %19 = vector.extract_strided_slice %17 {offsets = [128, 0], sizes = [128, 256], strides = [1, 1]} : vector<256x256xf32> to vector<128x256xf32>
    %20 = arith.mulf %19, %1 : vector<128x256xf32>
    %c0_13 = arith.constant 0 : index
    %c0_14 = arith.constant 0 : index
    %21 = vector.load %arg5[%c0_13, %c0_14] : memref<128x128xf32, #tpu.memory_space<vmem>>, vector<128x128xf32>
    %cst_15 = arith.constant dense<0.000000e+00> : vector<128x256xf32>
    %22 = tpu.matmul %21, %20, %cst_15 {dimension_numbers = #tpu.dot_dimension_numbers<[1], [0], [0], [1], [0, 0, 1, 1], [], []>} : vector<128x128xf32>, vector<128x256xf32>, vector<128x256xf32> -> vector<128x256xf32>
    %23 = vector.extract_strided_slice %8 {offsets = [256, 0], sizes = [128, 256], strides = [1, 1]} : vector<384x256xf32> to vector<128x256xf32>
    %24 = arith.addf %22, %23 : vector<128x256xf32>
    %25 = math.tanh %24 : vector<128x256xf32>
    %cst_16 = arith.constant 1.000000e+00 : f32
    %26 = vector.broadcast %cst_16 : f32 to vector<128x256xf32>
    %27 = arith.subf %26, %18 : vector<128x256xf32>
    %28 = arith.mulf %27, %1 : vector<128x256xf32>
    %29 = arith.mulf %18, %25 : vector<128x256xf32>
    %30 = arith.addf %28, %29 : vector<128x256xf32>
    %c0_17 = arith.constant 0 : index
    %c0_18 = arith.constant 0 : index
    %c0_19 = arith.constant 0 : index
    %31 = vector.load %arg8[%c0_17, %c0_18, %c0_19] : memref<1x128x256xf32, #tpu.memory_space<vmem>>, vector<1x128x256xf32>
    %32 = vector.shape_cast %31 : vector<1x128x256xf32> to vector<128x256xf32>
    %33 = vector.shape_cast %30 : vector<128x256xf32> to vector<1x128x256xf32>
    tpu.vector_store %arg8[%c0_17, %c0_18, %c0_19], %33 {strides = array<i32>} : memref<1x128x256xf32, #tpu.memory_space<vmem>>, vector<1x128x256xf32>,
    return
  }
  func.func @transform_0(%arg0: i32, %arg1: i32) -> (i32, i32, i32) {
    %c0_i32 = arith.constant 0 : i32
    %c0_i32_0 = arith.constant 0 : i32
    return %arg0, %c0_i32, %arg1 : i32, i32, i32
  }
  func.func @transform_1(%arg0: i32, %arg1: i32) -> (i32, i32, i32) {
    %c0_i32 = arith.constant 0 : i32
    %c0_i32_0 = arith.constant 0 : i32
    return %arg0, %c0_i32, %arg1 : i32, i32, i32
  }
  func.func @transform_2(%arg0: i32, %arg1: i32) -> (i32, i32) {
    %c0_i32 = arith.constant 0 : i32
    %c0_i32_0 = arith.constant 0 : i32
    %c0_i32_1 = arith.constant 0 : i32
    return %c0_i32, %c0_i32_0 : i32, i32
  }
  func.func @transform_3(%arg0: i32, %arg1: i32) -> (i32, i32) {
    %c0_i32 = arith.constant 0 : i32
    %c0_i32_0 = arith.constant 0 : i32
    %c0_i32_1 = arith.constant 0 : i32
    return %c0_i32, %c0_i32_0 : i32, i32
  }
  func.func @transform_4(%arg0: i32, %arg1: i32) -> (i32, i32) {
    %c0_i32 = arith.constant 0 : i32
    %c0_i32_0 = arith.constant 0 : i32
    %c0_i32_1 = arith.constant 0 : i32
    return %c0_i32, %c0_i32_0 : i32, i32
  }
  func.func @transform_5(%arg0: i32, %arg1: i32) -> (i32, i32) {
    %c0_i32 = arith.constant 0 : i32
    %c0_i32_0 = arith.constant 0 : i32
    %c0_i32_1 = arith.constant 0 : i32
    return %c0_i32, %c0_i32_0 : i32, i32
  }
  func.func @transform_6(%arg0: i32, %arg1: i32) -> (i32, i32, i32) {
    %c0_i32 = arith.constant 0 : i32
    %c0_i32_0 = arith.constant 0 : i32
    return %arg0, %c0_i32, %arg1 : i32, i32, i32
  }
}

</mosaic_0001>

<llo_original>
// kernel: _lambda_.1
$region0: #{_lambda_.1}
  #allocation0 [shape = 'u32[]', space=smem, size = 0x4, offset = 0x4, fixed_abs, tag = 'smem constant byte address 0x4 - core index']
  #allocation1 [shape = 'u32[144,128]{1,0:T(1,128)}', space=vmem, size = 0x12000, scoped, tag = 'internal scratch']
  %s0 = inlined_call_operand.vmem [shape: f32[2,128,256], index: 0, kind: input, shape index: {}]
  %s1 = inlined_call_operand.vmem [shape: f32[2,64,256], index: 1, kind: input, shape index: {}]
  %s2 = inlined_call_operand.vmem [shape: f32[256,128], index: 2, kind: input, shape index: {}]
  %s3 = inlined_call_operand.vmem [shape: f32[128,128], index: 3, kind: input, shape index: {}]
  %s4 = inlined_call_operand.vmem [shape: f32[384,64], index: 4, kind: input, shape index: {}]
  %s5 = inlined_call_operand.vmem [shape: f32[384,1], index: 5, kind: input, shape index: {}]
  %s6 = inlined_call_operand.vmem [shape: f32[2,128,256], index: 6, kind: output, shape index: {}]
  %s7 = sld [smem:[#allocation0]]
  $region57: #{_lambda_.1} parent=0
    _
  %s9 = ssub.s32 1, %s7
  %s10 = scalar_select 0, %s9, %s7
  loop: start=0, step=1, limit=4
  $region2: #{_lambda_.1} parent=0 // loop_pre_header
    _
  $region3: #{_lambda_.1} parent=0 // loop_header
    %s12 = sphi 0, %s16
    %p13 = scmp.ge.s32.totalorder %s12, 4
    %s19 = sphi 0, %s31
    %s20 = sphi 0, %s27
    %s21 = sphi 0, %s19
    %s22 = sphi 0, %s20
    %s23 = sphi 0, %s21
    %s24 = sphi 0, %s22
    %s36 = sphi 0, %s38
    %s39 = sphi 0, %s36
    %s40 = sphi 0, %s39
    %s56 = sphi 0, %s40
    %s64 = sphi 0, %s66
    %s67 = sphi 0, %s64
    %s68 = sphi 0, %s67
    %s84 = sphi 0, %s68
    %s88 = sphi 0, %s88
    %s90 = sphi 0, %s88
    %s91 = sphi 0, %s90
    %s105 = sphi 0, %s91
    %s109 = sphi 0, %s109
    %s111 = sphi 0, %s109
    %s112 = sphi 0, %s111
    %s126 = sphi 0, %s112
    %s130 = sphi 0, %s130
    %s132 = sphi 0, %s130
    %s133 = sphi 0, %s132
    %s147 = sphi 0, %s133
    %s151 = sphi 0, %s151
    %s153 = sphi 0, %s151
    %s154 = sphi 0, %s153
    %s168 = sphi 0, %s154
    %s176 = sphi 0, %s178
    %s179 = sphi 0, %s176
    %s180 = sphi 0, %s179
    %s196 = sphi 0, %s180
  $region4: #{_lambda_.1} parent=0 // loop_header_branch
    %15 = sbr.rel (%p13) target = $region8
  $region5: #{_lambda_.1} parent=0 // loop_body
    %s17 = ssub.s32 %s12, 1
    %s18 = ssub.s32 %s12, 2
    %s25 = sadd.s32 1, %s20
    %p26 = scmp.ge.s32.totalorder %s25, 1
    %s27 = scalar_select %p26, 0, %s25
    %s28 = sadd.s32 1, %s19
    %s29 = scalar_select %p26, %s28, %s19
    %p30 = scmp.ge.s32.totalorder %s29, 2
    %s31 = scalar_select %p30, 0, %s29
    %s32 = ssub.s32 %s19, %s31
    %s33 = ssub.s32 %s20, %s27
    %s34 = sor.u32 %s32, %s33
    %p35 = scmp.eq.s32.totalorder %s34, 0
    %s37 = sadd.s32 %s36, 1
    %s38 = scalar_select %p35, %s36, %s37
    %p41 = pneg %p35
    %p42 = scmp.eq.s32.totalorder %s12, 1
    %p43 = por %p41, %p42
    %p44 = scmp.ne.s32.totalorder %s36, %s39
    %p45 = scmp.eq.s32.totalorder %s12, 0
    %p46 = por %p44, %p45
    %p47 = scmp.ne.s32.totalorder %s36, %s39
    %p48 = scmp.eq.s32.totalorder %s17, 1
    %p49 = por %p47, %p48
    %p50 = scmp.ne.s32.totalorder %s39, %s40
    %p51 = scmp.eq.s32.totalorder %s17, 0
    %p52 = por %p50, %p51
    %p53 = scmp.ne.s32.totalorder %s39, %s40
    %p54 = scmp.eq.s32.totalorder %s18, 1
    %p55 = por %p53, %p54
    %p57 = scmp.ne.s32.totalorder %s40, %s56
    %p58 = scmp.eq.s32.totalorder %s18, 0
    %p59 = por %p57, %p58
    %s60 = ssub.s32 %s19, %s31
    %s61 = ssub.s32 %s20, %s27
    %s62 = sor.u32 %s60, %s61
    %p63 = scmp.eq.s32.totalorder %s62, 0
    %s65 = sadd.s32 %s64, 1
    %s66 = scalar_select %p63, %s64, %s65
    %p69 = pneg %p63
    %p70 = scmp.eq.s32.totalorder %s12, 1
    %p71 = por %p69, %p70
    %p72 = scmp.ne.s32.totalorder %s64, %s67
    %p73 = scmp.eq.s32.totalorder %s12, 0
    %p74 = por %p72, %p73
    %p75 = scmp.ne.s32.totalorder %s64, %s67
    %p76 = scmp.eq.s32.totalorder %s17, 1
    %p77 = por %p75, %p76
    %p78 = scmp.ne.s32.totalorder %s67, %s68
    %p79 = scmp.eq.s32.totalorder %s17, 0
    %p80 = por %p78, %p79
    %p81 = scmp.ne.s32.totalorder %s67, %s68
    %p82 = scmp.eq.s32.totalorder %s18, 1
    %p83 = por %p81, %p82
    %p85 = scmp.ne.s32.totalorder %s68, %s84
    %p86 = scmp.eq.s32.totalorder %s18, 0
    %p87 = por %p85, %p86
    %s89 = sadd.s32 %s88, 1
    %p92 = scmp.eq.s32.totalorder %s12, 1
    %p93 = scmp.ne.s32.totalorder %s88, %s90
    %p94 = scmp.eq.s32.totalorder %s12, 0
    %p95 = por %p93, %p94
    %p96 = scmp.ne.s32.totalorder %s88, %s90
    %p97 = scmp.eq.s32.totalorder %s17, 1
    %p98 = por %p96, %p97
    %p99 = scmp.ne.s32.totalorder %s90, %s91
    %p100 = scmp.eq.s32.totalorder %s17, 0
    %p101 = por %p99, %p100
    %p102 = scmp.ne.s32.totalorder %s90, %s91
    %p103 = scmp.eq.s32.totalorder %s18, 1
    %p104 = por %p102, %p103
    %p106 = scmp.ne.s32.totalorder %s91, %s105
    %p107 = scmp.eq.s32.totalorder %s18, 0
    %p108 = por %p106, %p107
    %s110 = sadd.s32 %s109, 1
    %p113 = scmp.eq.s32.totalorder %s12, 1
    %p114 = scmp.ne.s32.totalorder %s109, %s111
    %p115 = scmp.eq.s32.totalorder %s12, 0
    %p116 = por %p114, %p115
    %p117 = scmp.ne.s32.totalorder %s109, %s111
    %p118 = scmp.eq.s32.totalorder %s17, 1
    %p119 = por %p117, %p118
    %p120 = scmp.ne.s32.totalorder %s111, %s112
    %p121 = scmp.eq.s32.totalorder %s17, 0
    %p122 = por %p120, %p121
    %p123 = scmp.ne.s32.totalorder %s111, %s112
    %p124 = scmp.eq.s32.totalorder %s18, 1
    %p125 = por %p123, %p124
    %p127 = scmp.ne.s32.totalorder %s112, %s126
    %p128 = scmp.eq.s32.totalorder %s18, 0
    %p129 = por %p127, %p128
    %s131 = sadd.s32 %s130, 1
    %p134 = scmp.eq.s32.totalorder %s12, 1
    %p135 = scmp.ne.s32.totalorder %s130, %s132
    %p136 = scmp.eq.s32.totalorder %s12, 0
    %p137 = por %p135, %p136
    %p138 = scmp.ne.s32.totalorder %s130, %s132
    %p139 = scmp.eq.s32.totalorder %s17, 1
    %p140 = por %p138, %p139
    %p141 = scmp.ne.s32.totalorder %s132, %s133
    %p142 = scmp.eq.s32.totalorder %s17, 0
    %p143 = por %p141, %p142
    %p144 = scmp.ne.s32.totalorder %s132, %s133
    %p145 = scmp.eq.s32.totalorder %s18, 1
    %p146 = por %p144, %p145
    %p148 = scmp.ne.s32.totalorder %s133, %s147
    %p149 = scmp.eq.s32.totalorder %s18, 0
    %p150 = por %p148, %p149
    %s152 = sadd.s32 %s151, 1
    %p155 = scmp.eq.s32.totalorder %s12, 1
    %p156 = scmp.ne.s32.totalorder %s151, %s153
    %p157 = scmp.eq.s32.totalorder %s12, 0
    %p158 = por %p156, %p157
    %p159 = scmp.ne.s32.totalorder %s151, %s153
    %p160 = scmp.eq.s32.totalorder %s17, 1
    %p161 = por %p159, %p160
    %p162 = scmp.ne.s32.totalorder %s153, %s154
    %p163 = scmp.eq.s32.totalorder %s17, 0
    %p164 = por %p162, %p163
    %p165 = scmp.ne.s32.totalorder %s153, %s154
    %p166 = scmp.eq.s32.totalorder %s18, 1
    %p167 = por %p165, %p166
    %p169 = scmp.ne.s32.totalorder %s154, %s168
    %p170 = scmp.eq.s32.totalorder %s18, 0
    %p171 = por %p169, %p170
    %s172 = ssub.s32 %s19, %s31
    %s173 = ssub.s32 %s20, %s27
    %s174 = sor.u32 %s172, %s173
    %p175 = scmp.eq.s32.totalorder %s174, 0
    %s177 = sadd.s32 %s176, 1
    %s178 = scalar_select %p175, %s176, %s177
    %p181 = pneg %p175
    %p182 = scmp.eq.s32.totalorder %s12, 1
    %p183 = por %p181, %p182
    %p184 = scmp.ne.s32.totalorder %s176, %s179
    %p185 = scmp.eq.s32.totalorder %s12, 0
    %p186 = por %p184, %p185
    %p187 = scmp.ne.s32.totalorder %s176, %s179
    %p188 = scmp.eq.s32.totalorder %s17, 1
    %p189 = por %p187, %p188
    %p190 = scmp.ne.s32.totalorder %s179, %s180
    %p191 = scmp.eq.s32.totalorder %s17, 0
    %p192 = por %p190, %p191
    %p193 = scmp.ne.s32.totalorder %s179, %s180
    %p194 = scmp.eq.s32.totalorder %s18, 1
    %p195 = por %p193, %p194
    %p197 = scmp.ne.s32.totalorder %s180, %s196
    %p198 = scmp.eq.s32.totalorder %s18, 0
    %p199 = por %p197, %p198
    %p200 = scmp.le.s32.totalorder 1, %s12
    %p201 = scmp.lt.s32.totalorder %s12, 3
    %p202 = pnand %p200, %p201
    %p203 = pneg %p202
    // Predicated region
    $region9: #{_lambda_.1} parent=5 // pred_check
      _
    $region10: #{_lambda_.1} parent=5 // pred_check_branch
      %205 = sbr.rel (%p202) target = $region12
    $region11: #{_lambda_.1} parent=5 // pred_region
      %s206 = ssub.s32 %s12, 1
      // Predicated region
      $region13: #{_lambda_.1} parent=11 // pred_check
        %p207 = pneg %p101
      $region14: #{_lambda_.1} parent=11 // pred_check_branch
        %209 = sbr.rel (%p207) target = $region16
      $region15: #{_lambda_.1} parent=11 // pred_region
        _
      $region16: #{_lambda_.1} parent=11 // pred_fallthru
        _
      // Predicated region
      $region17: #{_lambda_.1} parent=11 // pred_check
        %p210 = pneg %p122
      $region18: #{_lambda_.1} parent=11 // pred_check_branch
        %212 = sbr.rel (%p210) target = $region20
      $region19: #{_lambda_.1} parent=11 // pred_region
        _
      $region20: #{_lambda_.1} parent=11 // pred_fallthru
        _
      // Predicated region
      $region21: #{_lambda_.1} parent=11 // pred_check
        %p213 = pneg %p143
      $region22: #{_lambda_.1} parent=11 // pred_check_branch
        %215 = sbr.rel (%p213) target = $region24
      $region23: #{_lambda_.1} parent=11 // pred_region
        _
      $region24: #{_lambda_.1} parent=11 // pred_fallthru
        _
      // Predicated region
      $region25: #{_lambda_.1} parent=11 // pred_check
        %p216 = pneg %p164
      $region26: #{_lambda_.1} parent=11 // pred_check_branch
        %218 = sbr.rel (%p216) target = $region28
      $region27: #{_lambda_.1} parent=11 // pred_region
        _
      $region28: #{_lambda_.1} parent=11 // pred_fallthru
        _
    $region12: #{_lambda_.1} parent=5 // pred_fallthru
      _
    %p219 = scmp.lt.s32.totalorder %s12, 2
    // Predicated region
    $region29: #{_lambda_.1} parent=5 // pred_check
      %p220 = pneg %p219
    $region30: #{_lambda_.1} parent=5 // pred_check_branch
      %222 = sbr.rel (%p220) target = $region32
    $region31: #{_lambda_.1} parent=5 // pred_region
      // Predicated region
      $region33: #{_lambda_.1} parent=31 // pred_check
        %p223 = pneg %p46
      $region34: #{_lambda_.1} parent=31 // pred_check_branch
        %225 = sbr.rel (%p223) target = $region36
      $region35: #{_lambda_.1} parent=31 // pred_region
        %s226 = smul.u32 2, %s20
        %p227 = scmp.lt.s32.totalorder %s19, 1
        %s228 = scalar_select %p227, %s19, 1
        %p229 = scmp.lt.s32.totalorder %s226, 1
        %s230 = scalar_select %p229, %s226, 1
        %s231 = smul.addr %s228, 32
        %s232 = sadd.s32 %s230, %s231
        %s233 = smul.addr %s232, 8
        %s234 = scalar_lea.vmem %s0, %s233
        %s235 = smul.u32 2, %s20
      $region36: #{_lambda_.1} parent=31 // pred_fallthru
        _
      // Predicated region
      $region37: #{_lambda_.1} parent=31 // pred_check
        %p236 = pneg %p74
      $region38: #{_lambda_.1} parent=31 // pred_check_branch
        %238 = sbr.rel (%p236) target = $region40
      $region39: #{_lambda_.1} parent=31 // pred_region
        %s239 = smul.u32 2, %s20
        %p240 = scmp.lt.s32.totalorder %s19, 1
        %s241 = scalar_select %p240, %s19, 1
        %p242 = scmp.lt.s32.totalorder %s239, 1
        %s243 = scalar_select %p242, %s239, 1
        %s244 = smul.addr %s241, 16
        %s245 = sadd.s32 %s243, %s244
        %s246 = smul.addr %s245, 8
        %s247 = scalar_lea.vmem %s1, %s246
        %s248 = smul.u32 2, %s20
      $region40: #{_lambda_.1} parent=31 // pred_fallthru
        _
    $region32: #{_lambda_.1} parent=5 // pred_fallthru
      _
    %p249 = scmp.le.s32.totalorder 1, %s12
    %p250 = scmp.lt.s32.totalorder %s12, 3
    %p251 = pnand %p249, %p250
    %p252 = pneg %p251
    // Predicated region
    $region41: #{_lambda_.1} parent=5 // pred_check
      _
    $region42: #{_lambda_.1} parent=5 // pred_check_branch
      %254 = sbr.rel (%p251) target = $region44
    $region43: #{_lambda_.1} parent=5 // pred_region
      %s255 = ssub.s32 %s12, 1
      %s256 = smul.u32 2, %s22
      %p257 = scmp.lt.s32.totalorder %s21, 1
      %s258 = scalar_select %p257, %s21, 1
      %p259 = scmp.lt.s32.totalorder %s256, 1
      %s260 = scalar_select %p259, %s256, 1
      %s261 = smul.addr %s258, 32
      %s262 = sadd.s32 %s260, %s261
      %s263 = smul.addr %s262, 8
      %s264 = scalar_lea.vmem %s0, %s263
      %p265 = pneg %p52
      %p266 = pneg %p49
      %s267 = smul.u32 2, %s22
      %p268 = scmp.lt.s32.totalorder %s21, 1
      %s269 = scalar_select %p268, %s21, 1
      %p270 = scmp.lt.s32.totalorder %s267, 1
      %s271 = scalar_select %p270, %s267, 1
      %s272 = smul.addr %s269, 16
      %s273 = sadd.s32 %s271, %s272
      %s274 = smul.addr %s273, 8
      %s275 = scalar_lea.vmem %s1, %s274
      %p276 = pneg %p80
      %p277 = pneg %p77
      %p278 = pneg %p101
      %p279 = pneg %p98
      %p280 = pneg %p122
      %p281 = pneg %p119
      %p282 = pneg %p143
      %p283 = pneg %p140
      %p284 = pneg %p164
      %p285 = pneg %p161
      %p286 = pneg %p192
      %p287 = pneg %p189
      %s288 = smul.u32 2, %s22
      %p289 = scmp.lt.s32.totalorder %s21, 1
      %s290 = scalar_select %p289, %s21, 1
      %p291 = scmp.lt.s32.totalorder %s288, 1
      %s292 = scalar_select %p291, %s288, 1
      %s293 = smul.addr %s290, 32
      %s294 = sadd.s32 %s292, %s293
      %s295 = smul.addr %s294, 8
      %s296 = scalar_lea.vmem %s6, %s295
      %s297 = smul.u32 2, %s22
      %p298 = scmp.lt.s32.totalorder %s21, 1
      %s299 = scalar_select %p298, %s21, 1
      %p300 = scmp.lt.s32.totalorder %s297, 1
      %s301 = scalar_select %p300, %s297, 1
      %s302 = smul.addr %s299, 32
      %s303 = sadd.s32 %s301, %s302
      %s304 = smul.addr %s303, 8
      %s305 = scalar_lea.vmem %s0, %s304
      %s306 = smul.u32 2, %s22
      %s307 = smul.u32 2, %s22
      %p308 = scmp.lt.s32.totalorder %s21, 1
      %s309 = scalar_select %p308, %s21, 1
      %p310 = scmp.lt.s32.totalorder %s307, 1
      %s311 = scalar_select %p310, %s307, 1
      %s312 = smul.addr %s309, 16
      %s313 = sadd.s32 %s311, %s312
      %s314 = smul.addr %s313, 8
      %s315 = scalar_lea.vmem %s1, %s314
      %s316 = smul.u32 2, %s22
      %s317 = smul.u32 2, %s22
      %p318 = scmp.lt.s32.totalorder %s21, 1
      %s319 = scalar_select %p318, %s21, 1
      %p320 = scmp.lt.s32.totalorder %s317, 1
      %s321 = scalar_select %p320, %s317, 1
      %s322 = smul.addr %s319, 32
      %s323 = sadd.s32 %s321, %s322
      %s324 = smul.addr %s323, 8
      %s325 = scalar_lea.vmem %s6, %s324
      %s326 = smul.u32 2, %s22
      %v327 = vld [vmem:[%s305] sm:$0xff]
      %v328 = vld [vmem:[%s305 + $0x8] sm:$0xff]
      %v329 = vld [vmem:[%s305 + $0x10] sm:$0xff]
      %v330 = vld [vmem:[%s305 + $0x18] sm:$0xff]
      %v331 = vld [vmem:[%s305 + $0x20] sm:$0xff]
      %v332 = vld [vmem:[%s305 + $0x28] sm:$0xff]
      %v333 = vld [vmem:[%s305 + $0x30] sm:$0xff]
      %v334 = vld [vmem:[%s305 + $0x38] sm:$0xff]
      %v335 = vld [vmem:[%s305 + $0x40] sm:$0xff]
      %v336 = vld [vmem:[%s305 + $0x48] sm:$0xff]
      %v337 = vld [vmem:[%s305 + $0x50] sm:$0xff]
      %v338 = vld [vmem:[%s305 + $0x58] sm:$0xff]
      %v339 = vld [vmem:[%s305 + $0x60] sm:$0xff]
      %v340 = vld [vmem:[%s305 + $0x68] sm:$0xff]
      %v341 = vld [vmem:[%s305 + $0x70] sm:$0xff]
      %v342 = vld [vmem:[%s305 + $0x78] sm:$0xff]
      %v343 = vld [vmem:[%s305 + $0x80] sm:$0xff]
      %v344 = vld [vmem:[%s305 + $0x88] sm:$0xff]
      %v345 = vld [vmem:[%s305 + $0x90] sm:$0xff]
      %v346 = vld [vmem:[%s305 + $0x98] sm:$0xff]
      %v347 = vld [vmem:[%s305 + $0xa0] sm:$0xff]
      %v348 = vld [vmem:[%s305 + $0xa8] sm:$0xff]
      %v349 = vld [vmem:[%s305 + $0xb0] sm:$0xff]
      %v350 = vld [vmem:[%s305 + $0xb8] sm:$0xff]
      %v351 = vld [vmem:[%s305 + $0xc0] sm:$0xff]
      %v352 = vld [vmem:[%s305 + $0xc8] sm:$0xff]
      %v353 = vld [vmem:[%s305 + $0xd0] sm:$0xff]
      %v354 = vld [vmem:[%s305 + $0xd8] sm:$0xff]
      %v355 = vld [vmem:[%s305 + $0xe0] sm:$0xff]
      %v356 = vld [vmem:[%s305 + $0xe8] sm:$0xff]
      %v357 = vld [vmem:[%s305 + $0xf0] sm:$0xff]
      %v358 = vld [vmem:[%s305 + $0xf8] sm:$0xff]
      %v359 = vld [vmem:[%s315] sm:$0xff]
      %v360 = vld [vmem:[%s315 + $0x8] sm:$0xff]
      %v361 = vld [vmem:[%s315 + $0x10] sm:$0xff]
      %v362 = vld [vmem:[%s315 + $0x18] sm:$0xff]
      %v363 = vld [vmem:[%s315 + $0x20] sm:$0xff]
      %v364 = vld [vmem:[%s315 + $0x28] sm:$0xff]
      %v365 = vld [vmem:[%s315 + $0x30] sm:$0xff]
      %v366 = vld [vmem:[%s315 + $0x38] sm:$0xff]
      %v367 = vld [vmem:[%s315 + $0x40] sm:$0xff]
      %v368 = vld [vmem:[%s315 + $0x48] sm:$0xff]
      %v369 = vld [vmem:[%s315 + $0x50] sm:$0xff]
      %v370 = vld [vmem:[%s315 + $0x58] sm:$0xff]
      %v371 = vld [vmem:[%s315 + $0x60] sm:$0xff]
      %v372 = vld [vmem:[%s315 + $0x68] sm:$0xff]
      %v373 = vld [vmem:[%s315 + $0x70] sm:$0xff]
      %v374 = vld [vmem:[%s315 + $0x78] sm:$0xff]
      %v375 = vld [vmem:[%s4] sm:$0xff]
      %v376 = vld [vmem:[%s4 + $0x8] sm:$0xff]
      %v377 = vld [vmem:[%s4 + $0x10] sm:$0xff]
      %v378 = vld [vmem:[%s4 + $0x18] sm:$0xff]
      %v379 = vld [vmem:[%s4 + $0x20] sm:$0xff]
      %v380 = vld [vmem:[%s4 + $0x28] sm:$0xff]
      %v381 = vld [vmem:[%s4 + $0x30] sm:$0xff]
      %v382 = vld [vmem:[%s4 + $0x38] sm:$0xff]
      %v383 = vld [vmem:[%s4 + $0x40] sm:$0xff]
      %v384 = vld [vmem:[%s4 + $0x48] sm:$0xff]
      %v385 = vld [vmem:[%s4 + $0x50] sm:$0xff]
      %v386 = vld [vmem:[%s4 + $0x58] sm:$0xff]
      %v387 = vld [vmem:[%s4 + $0x60] sm:$0xff]
      %v388 = vld [vmem:[%s4 + $0x68] sm:$0xff]
      %v389 = vld [vmem:[%s4 + $0x70] sm:$0xff]
      %v390 = vld [vmem:[%s4 + $0x78] sm:$0xff]
      %v391 = vld [vmem:[%s4 + $0x80] sm:$0xff]
      %v392 = vld [vmem:[%s4 + $0x88] sm:$0xff]
      %v393 = vld [vmem:[%s4 + $0x90] sm:$0xff]
      %v394 = vld [vmem:[%s4 + $0x98] sm:$0xff]
      %v395 = vld [vmem:[%s4 + $0xa0] sm:$0xff]
      %v396 = vld [vmem:[%s4 + $0xa8] sm:$0xff]
      %v397 = vld [vmem:[%s4 + $0xb0] sm:$0xff]
      %v398 = vld [vmem:[%s4 + $0xb8] sm:$0xff]
      %v399 = vld [vmem:[%s4 + $0xc0] sm:$0xff]
      %v400 = vld [vmem:[%s4 + $0xc8] sm:$0xff]
      %v401 = vld [vmem:[%s4 + $0xd0] sm:$0xff]
      %v402 = vld [vmem:[%s4 + $0xd8] sm:$0xff]
      %v403 = vld [vmem:[%s4 + $0xe0] sm:$0xff]
      %v404 = vld [vmem:[%s4 + $0xe8] sm:$0xff]
      %v405 = vld [vmem:[%s4 + $0xf0] sm:$0xff]
      %v406 = vld [vmem:[%s4 + $0xf8] sm:$0xff]
      %v407 = vld [vmem:[%s4 + $0x100] sm:$0xff]
      %v408 = vld [vmem:[%s4 + $0x108] sm:$0xff]
      %v409 = vld [vmem:[%s4 + $0x110] sm:$0xff]
      %v410 = vld [vmem:[%s4 + $0x118] sm:$0xff]
      %v411 = vld [vmem:[%s4 + $0x120] sm:$0xff]
      %v412 = vld [vmem:[%s4 + $0x128] sm:$0xff]
      %v413 = vld [vmem:[%s4 + $0x130] sm:$0xff]
      %v414 = vld [vmem:[%s4 + $0x138] sm:$0xff]
      %v415 = vld [vmem:[%s4 + $0x140] sm:$0xff]
      %v416 = vld [vmem:[%s4 + $0x148] sm:$0xff]
      %v417 = vld [vmem:[%s4 + $0x150] sm:$0xff]
      %v418 = vld [vmem:[%s4 + $0x158] sm:$0xff]
      %v419 = vld [vmem:[%s4 + $0x160] sm:$0xff]
      %v420 = vld [vmem:[%s4 + $0x168] sm:$0xff]
      %v421 = vld [vmem:[%s4 + $0x170] sm:$0xff]
      %v422 = vld [vmem:[%s4 + $0x178] sm:$0xff]
      %v423 = vld [vmem:[%s5] sm:$0xff]
      %v424 = vld [vmem:[%s5 + $0x8] sm:$0xff]
      %v425 = vld [vmem:[%s5 + $0x10] sm:$0xff]
      %v426 = vld [vmem:[%s5 + $0x18] sm:$0xff]
      %v427 = vld [vmem:[%s5 + $0x20] sm:$0xff]
      %v428 = vld [vmem:[%s5 + $0x28] sm:$0xff]
      %v429 = vld [vmem:[%s5 + $0x30] sm:$0xff]
      %v430 = vld [vmem:[%s5 + $0x38] sm:$0xff]
      %v431 = vld [vmem:[%s5 + $0x40] sm:$0xff]
      %v432 = vld [vmem:[%s5 + $0x48] sm:$0xff]
      %v433 = vld [vmem:[%s5 + $0x50] sm:$0xff]
      %v434 = vld [vmem:[%s5 + $0x58] sm:$0xff]
      %v435 = vld [vmem:[%s5 + $0x60] sm:$0xff]
      %v436 = vld [vmem:[%s5 + $0x68] sm:$0xff]
      %v437 = vld [vmem:[%s5 + $0x70] sm:$0xff]
      %v438 = vld [vmem:[%s5 + $0x78] sm:$0xff]
      %v439 = vld [vmem:[%s5 + $0x80] sm:$0xff]
      %v440 = vld [vmem:[%s5 + $0x88] sm:$0xff]
      %v441 = vld [vmem:[%s5 + $0x90] sm:$0xff]
      %v442 = vld [vmem:[%s5 + $0x98] sm:$0xff]
      %v443 = vld [vmem:[%s5 + $0xa0] sm:$0xff]
      %v444 = vld [vmem:[%s5 + $0xa8] sm:$0xff]
      %v445 = vld [vmem:[%s5 + $0xb0] sm:$0xff]
      %v446 = vld [vmem:[%s5 + $0xb8] sm:$0xff]
      %v447 = vld [vmem:[%s5 + $0xc0] sm:$0xff]
      %v448 = vld [vmem:[%s5 + $0xc8] sm:$0xff]
      %v449 = vld [vmem:[%s5 + $0xd0] sm:$0xff]
      %v450 = vld [vmem:[%s5 + $0xd8] sm:$0xff]
      %v451 = vld [vmem:[%s5 + $0xe0] sm:$0xff]
      %v452 = vld [vmem:[%s5 + $0xe8] sm:$0xff]
      %v453 = vld [vmem:[%s5 + $0xf0] sm:$0xff]
      %v454 = vld [vmem:[%s5 + $0xf8] sm:$0xff]
      %v455 = vld [vmem:[%s5 + $0x100] sm:$0xff]
      %v456 = vld [vmem:[%s5 + $0x108] sm:$0xff]
      %v457 = vld [vmem:[%s5 + $0x110] sm:$0xff]
      %v458 = vld [vmem:[%s5 + $0x118] sm:$0xff]
      %v459 = vld [vmem:[%s5 + $0x120] sm:$0xff]
      %v460 = vld [vmem:[%s5 + $0x128] sm:$0xff]
      %v461 = vld [vmem:[%s5 + $0x130] sm:$0xff]
      %v462 = vld [vmem:[%s5 + $0x138] sm:$0xff]
      %v463 = vld [vmem:[%s5 + $0x140] sm:$0xff]
      %v464 = vld [vmem:[%s5 + $0x148] sm:$0xff]
      %v465 = vld [vmem:[%s5 + $0x150] sm:$0xff]
      %v466 = vld [vmem:[%s5 + $0x158] sm:$0xff]
      %v467 = vld [vmem:[%s5 + $0x160] sm:$0xff]
      %v468 = vld [vmem:[%s5 + $0x168] sm:$0xff]
      %v469 = vld [vmem:[%s5 + $0x170] sm:$0xff]
      %v470 = vld [vmem:[%s5 + $0x178] sm:$0xff]
      %472 = vset.pattern.permute.xlu0 0
      %473 = vperm.xlu0 %472, %v423
      %v474 = vpop.permute.xlu0 %473
      %477 = vset.pattern.permute.xlu0 0
      %478 = vperm.xlu0 %477, %v424
      %v479 = vpop.permute.xlu0 %478
      %482 = vset.pattern.permute.xlu0 0
      %483 = vperm.xlu0 %482, %v425
      %v484 = vpop.permute.xlu0 %483
      %487 = vset.pattern.permute.xlu0 0
      %488 = vperm.xlu0 %487, %v426
      %v489 = vpop.permute.xlu0 %488
      %492 = vset.pattern.permute.xlu0 0
      %493 = vperm.xlu0 %492, %v427
      %v494 = vpop.permute.xlu0 %493
      %497 = vset.pattern.permute.xlu0 0
      %498 = vperm.xlu0 %497, %v428
      %v499 = vpop.permute.xlu0 %498
      %502 = vset.pattern.permute.xlu0 0
      %503 = vperm.xlu0 %502, %v429
      %v504 = vpop.permute.xlu0 %503
      %507 = vset.pattern.permute.xlu0 0
      %508 = vperm.xlu0 %507, %v430
      %v509 = vpop.permute.xlu0 %508
      %512 = vset.pattern.permute.xlu0 0
      %513 = vperm.xlu0 %512, %v431
      %v514 = vpop.permute.xlu0 %513
      %517 = vset.pattern.permute.xlu0 0
      %518 = vperm.xlu0 %517, %v432
      %v519 = vpop.permute.xlu0 %518
      %522 = vset.pattern.permute.xlu0 0
      %523 = vperm.xlu0 %522, %v433
      %v524 = vpop.permute.xlu0 %523
      %527 = vset.pattern.permute.xlu0 0
      %528 = vperm.xlu0 %527, %v434
      %v529 = vpop.permute.xlu0 %528
      %532 = vset.pattern.permute.xlu0 0
      %533 = vperm.xlu0 %532, %v435
      %v534 = vpop.permute.xlu0 %533
      %537 = vset.pattern.permute.xlu0 0
      %538 = vperm.xlu0 %537, %v436
      %v539 = vpop.permute.xlu0 %538
      %542 = vset.pattern.permute.xlu0 0
      %543 = vperm.xlu0 %542, %v437
      %v544 = vpop.permute.xlu0 %543
      %547 = vset.pattern.permute.xlu0 0
      %548 = vperm.xlu0 %547, %v438
      %v549 = vpop.permute.xlu0 %548
      %552 = vset.pattern.permute.xlu0 0
      %553 = vperm.xlu0 %552, %v439
      %v554 = vpop.permute.xlu0 %553
      %557 = vset.pattern.permute.xlu0 0
      %558 = vperm.xlu0 %557, %v440
      %v559 = vpop.permute.xlu0 %558
      %562 = vset.pattern.permute.xlu0 0
      %563 = vperm.xlu0 %562, %v441
      %v564 = vpop.permute.xlu0 %563
      %567 = vset.pattern.permute.xlu0 0
      %568 = vperm.xlu0 %567, %v442
      %v569 = vpop.permute.xlu0 %568
      %572 = vset.pattern.permute.xlu0 0
      %573 = vperm.xlu0 %572, %v443
      %v574 = vpop.permute.xlu0 %573
      %577 = vset.pattern.permute.xlu0 0
      %578 = vperm.xlu0 %577, %v444
      %v579 = vpop.permute.xlu0 %578
      %582 = vset.pattern.permute.xlu0 0
      %583 = vperm.xlu0 %582, %v445
      %v584 = vpop.permute.xlu0 %583
      %587 = vset.pattern.permute.xlu0 0
      %588 = vperm.xlu0 %587, %v446
      %v589 = vpop.permute.xlu0 %588
      %592 = vset.pattern.permute.xlu0 0
      %593 = vperm.xlu0 %592, %v447
      %v594 = vpop.permute.xlu0 %593
      %597 = vset.pattern.permute.xlu0 0
      %598 = vperm.xlu0 %597, %v448
      %v599 = vpop.permute.xlu0 %598
      %602 = vset.pattern.permute.xlu0 0
      %603 = vperm.xlu0 %602, %v449
      %v604 = vpop.permute.xlu0 %603
      %607 = vset.pattern.permute.xlu0 0
      %608 = vperm.xlu0 %607, %v450
      %v609 = vpop.permute.xlu0 %608
      %612 = vset.pattern.permute.xlu0 0
      %613 = vperm.xlu0 %612, %v451
      %v614 = vpop.permute.xlu0 %613
      %617 = vset.pattern.permute.xlu0 0
      %618 = vperm.xlu0 %617, %v452
      %v619 = vpop.permute.xlu0 %618
      %622 = vset.pattern.permute.xlu0 0
      %623 = vperm.xlu0 %622, %v453
      %v624 = vpop.permute.xlu0 %623
      %627 = vset.pattern.permute.xlu0 0
      %628 = vperm.xlu0 %627, %v454
      %v629 = vpop.permute.xlu0 %628
      %632 = vset.pattern.permute.xlu0 0
      %633 = vperm.xlu0 %632, %v455
      %v634 = vpop.permute.xlu0 %633
      %637 = vset.pattern.permute.xlu0 0
      %638 = vperm.xlu0 %637, %v456
      %v639 = vpop.permute.xlu0 %638
      %642 = vset.pattern.permute.xlu0 0
      %643 = vperm.xlu0 %642, %v457
      %v644 = vpop.permute.xlu0 %643
      %647 = vset.pattern.permute.xlu0 0
      %648 = vperm.xlu0 %647, %v458
      %v649 = vpop.permute.xlu0 %648
      %652 = vset.pattern.permute.xlu0 0
      %653 = vperm.xlu0 %652, %v459
      %v654 = vpop.permute.xlu0 %653
      %657 = vset.pattern.permute.xlu0 0
      %658 = vperm.xlu0 %657, %v460
      %v659 = vpop.permute.xlu0 %658
      %662 = vset.pattern.permute.xlu0 0
      %663 = vperm.xlu0 %662, %v461
      %v664 = vpop.permute.xlu0 %663
      %667 = vset.pattern.permute.xlu0 0
      %668 = vperm.xlu0 %667, %v462
      %v669 = vpop.permute.xlu0 %668
      %672 = vset.pattern.permute.xlu0 0
      %673 = vperm.xlu0 %672, %v463
      %v674 = vpop.permute.xlu0 %673
      %677 = vset.pattern.permute.xlu0 0
      %678 = vperm.xlu0 %677, %v464
      %v679 = vpop.permute.xlu0 %678
      %682 = vset.pattern.permute.xlu0 0
      %683 = vperm.xlu0 %682, %v465
      %v684 = vpop.permute.xlu0 %683
      %687 = vset.pattern.permute.xlu0 0
      %688 = vperm.xlu0 %687, %v466
      %v689 = vpop.permute.xlu0 %688
      %692 = vset.pattern.permute.xlu0 0
      %693 = vperm.xlu0 %692, %v467
      %v694 = vpop.permute.xlu0 %693
      %697 = vset.pattern.permute.xlu0 0
      %698 = vperm.xlu0 %697, %v468
      %v699 = vpop.permute.xlu0 %698
      %702 = vset.pattern.permute.xlu0 0
      %703 = vperm.xlu0 %702, %v469
      %v704 = vpop.permute.xlu0 %703
      %707 = vset.pattern.permute.xlu0 0
      %708 = vperm.xlu0 %707, %v470
      %v709 = vpop.permute.xlu0 %708
      %vm711 = vcmask 523264
      %v713 = vsel %vm711, %v375, 0
      %v716 = vsel %vm711, %v376, 0
      %v719 = vsel %vm711, %v377, 0
      %v722 = vsel %vm711, %v378, 0
      %v725 = vsel %vm711, %v379, 0
      %v728 = vsel %vm711, %v380, 0
      %v731 = vsel %vm711, %v381, 0
      %v734 = vsel %vm711, %v382, 0
      %v737 = vsel %vm711, %v383, 0
      %v740 = vsel %vm711, %v384, 0
      %v743 = vsel %vm711, %v385, 0
      %v746 = vsel %vm711, %v386, 0
      %v749 = vsel %vm711, %v387, 0
      %v752 = vsel %vm711, %v388, 0
      %v755 = vsel %vm711, %v389, 0
      %v758 = vsel %vm711, %v390, 0
      %v761 = vsel %vm711, %v391, 0
      %v764 = vsel %vm711, %v392, 0
      %v767 = vsel %vm711, %v393, 0
      %v770 = vsel %vm711, %v394, 0
      %v773 = vsel %vm711, %v395, 0
      %v776 = vsel %vm711, %v396, 0
      %v779 = vsel %vm711, %v397, 0
      %v782 = vsel %vm711, %v398, 0
      %v785 = vsel %vm711, %v399, 0
      %v788 = vsel %vm711, %v400, 0
      %v791 = vsel %vm711, %v401, 0
      %v794 = vsel %vm711, %v402, 0
      %v797 = vsel %vm711, %v403, 0
      %v800 = vsel %vm711, %v404, 0
      %v803 = vsel %vm711, %v405, 0
      %v806 = vsel %vm711, %v406, 0
      %v809 = vsel %vm711, %v407, 0
      %v812 = vsel %vm711, %v408, 0
      %v815 = vsel %vm711, %v409, 0
      %v818 = vsel %vm711, %v410, 0
      %v821 = vsel %vm711, %v411, 0
      %v824 = vsel %vm711, %v412, 0
      %v827 = vsel %vm711, %v413, 0
      %v830 = vsel %vm711, %v414, 0
      %v833 = vsel %vm711, %v415, 0
      %v836 = vsel %vm711, %v416, 0
      %v839 = vsel %vm711, %v417, 0
      %v842 = vsel %vm711, %v418, 0
      %v845 = vsel %vm711, %v419, 0
      %v848 = vsel %vm711, %v420, 0
      %v851 = vsel %vm711, %v421, 0
      %v854 = vsel %vm711, %v422, 0
      %856 = vmatprep.subr.mxu0 %v360
      %857 = vmatpush1.msra.mxu0 %v359
      %858 = vmatprep.subr.mxu0 %v362
      %859 = vmatpush1.msra.mxu0 %v361
      %860 = vmatprep.subr.mxu0 %v364
      %861 = vmatpush1.msra.mxu0 %v363
      %862 = vmatprep.subr.mxu0 %v366
      %863 = vmatpush1.msra.mxu0 %v365
      %864 = vmatprep.subr.mxu0 %v368
      %865 = vmatpush1.msra.mxu0 %v367
      %866 = vmatprep.subr.mxu0 %v370
      %867 = vmatpush1.msra.mxu0 %v369
      %868 = vmatprep.subr.mxu0 %v372
      %869 = vmatpush1.msra.mxu0 %v371
      %870 = vmatprep.subr.mxu0 %v374
      %871 = vmatpush1.msra.mxu0 %v373
      %872 = vmatprep.subr.mxu0 0.0
      %873 = vmatpush1.msra.mxu0 0.0
      %874 = vmatprep.subr.mxu0 0.0
      %875 = vmatpush1.msra.mxu0 0.0
      %876 = vmatprep.subr.mxu0 0.0
      %877 = vmatpush1.msra.mxu0 0.0
      %878 = vmatprep.subr.mxu0 0.0
      %879 = vmatpush1.msra.mxu0 0.0
      %880 = vmatprep.subr.mxu0 0.0
      %881 = vmatpush1.msra.mxu0 0.0
      %882 = vmatprep.subr.mxu0 0.0
      %883 = vmatpush1.msra.mxu0 0.0
      %884 = vmatprep.subr.mxu0 0.0
      %885 = vmatpush1.msra.mxu0 0.0
      %886 = vmatprep.subr.mxu0 0.0
      %887 = vmatpush1.msra.mxu0 0.0
      %888 = vmatprep.subr.mxu0 0.0
      %889 = vmatpush1.msra.mxu0 0.0
      %890 = vmatprep.subr.mxu0 0.0
      %891 = vmatpush1.msra.mxu0 0.0
      %892 = vmatprep.subr.mxu0 0.0
      %893 = vmatpush1.msra.mxu0 0.0
      %894 = vmatprep.subr.mxu0 0.0
      %895 = vmatpush1.msra.mxu0 0.0
      %896 = vmatprep.subr.mxu0 0.0
      %897 = vmatpush1.msra.mxu0 0.0
      %898 = vmatprep.subr.mxu0 0.0
      %899 = vmatpush1.msra.mxu0 0.0
      %900 = vmatprep.subr.mxu0 0.0
      %901 = vmatpush1.msra.mxu0 0.0
      %902 = vmatprep.subr.mxu0 0.0
      %903 = vmatpush1.msra.mxu0 0.0
      %904 = vmatprep.subr.mxu0 0.0
      %905 = vmatpush1.msra.mxu0 0.0
      %906 = vmatprep.subr.mxu0 0.0
      %907 = vmatpush1.msra.mxu0 0.0
      %908 = vmatprep.subr.mxu0 0.0
      %909 = vmatpush1.msra.mxu0 0.0
      %910 = vmatprep.subr.mxu0 0.0
      %911 = vmatpush1.msra.mxu0 0.0
      %912 = vmatprep.subr.mxu0 0.0
      %913 = vmatpush1.msra.mxu0 0.0
      %914 = vmatprep.subr.mxu0 0.0
      %915 = vmatpush1.msra.mxu0 0.0
      %916 = vmatprep.subr.mxu0 0.0
      %917 = vmatpush1.msra.mxu0 0.0
      %918 = vmatprep.subr.mxu0 0.0
      %919 = vmatpush1.msra.mxu0 0.0
      %920 = vmatprep.mubr.f32.mxu0 0.0
      %921 = vmatmul.mubr.f32.gmra.mrb[0].mxu0 %v713
      %v922 = vpop.f32.mrb[0].mxu0
      %v923 = vadd.f32 %v474, %v922
      %v924 = vpop.f32.mrb[0].mxu0
      %v925 = vadd.f32 %v474, %v924
      %926 = vmatprep.mubr.f32.mxu0 0.0
      %927 = vmatmul.mubr.f32.gmra.mrb[0].mxu0 %v716
      %v928 = vpop.f32.mrb[0].mxu0
      %v929 = vadd.f32 %v479, %v928
      %v930 = vpop.f32.mrb[0].mxu0
      %v931 = vadd.f32 %v479, %v930
      %932 = vmatprep.mubr.f32.mxu0 0.0
      %933 = vmatmul.mubr.f32.gmra.mrb[0].mxu0 %v719
      %v934 = vpop.f32.mrb[0].mxu0
      %v935 = vadd.f32 %v484, %v934
      %v936 = vpop.f32.mrb[0].mxu0
      %v937 = vadd.f32 %v484, %v936
      %938 = vmatprep.mubr.f32.mxu0 0.0
      %939 = vmatmul.mubr.f32.gmra.mrb[0].mxu0 %v722
      %v940 = vpop.f32.mrb[0].mxu0
      %v941 = vadd.f32 %v489, %v940
      %v942 = vpop.f32.mrb[0].mxu0
      %v943 = vadd.f32 %v489, %v942
      %944 = vmatprep.mubr.f32.mxu0 0.0
      %945 = vmatmul.mubr.f32.gmra.mrb[0].mxu0 %v725
      %v946 = vpop.f32.mrb[0].mxu0
      %v947 = vadd.f32 %v494, %v946
      %v948 = vpop.f32.mrb[0].mxu0
      %v949 = vadd.f32 %v494, %v948
      %950 = vmatprep.mubr.f32.mxu0 0.0
      %951 = vmatmul.mubr.f32.gmra.mrb[0].mxu0 %v728
      %v952 = vpop.f32.mrb[0].mxu0
      %v953 = vadd.f32 %v499, %v952
      %v954 = vpop.f32.mrb[0].mxu0
      %v955 = vadd.f32 %v499, %v954
      %956 = vmatprep.mubr.f32.mxu0 0.0
      %957 = vmatmul.mubr.f32.gmra.mrb[0].mxu0 %v731
      %v958 = vpop.f32.mrb[0].mxu0
      %v959 = vadd.f32 %v504, %v958
      %v960 = vpop.f32.mrb[0].mxu0
      %v961 = vadd.f32 %v504, %v960
      %962 = vmatprep.mubr.f32.mxu0 0.0
      %963 = vmatmul.mubr.f32.gmra.mrb[0].mxu0 %v734
      %v964 = vpop.f32.mrb[0].mxu0
      %v965 = vadd.f32 %v509, %v964
      %v966 = vpop.f32.mrb[0].mxu0
      %v967 = vadd.f32 %v509, %v966
      %968 = vmatprep.mubr.f32.mxu0 0.0
      %969 = vmatmul.mubr.f32.gmra.mrb[0].mxu0 %v737
      %v970 = vpop.f32.mrb[0].mxu0
      %v971 = vadd.f32 %v514, %v970
      %v972 = vpop.f32.mrb[0].mxu0
      %v973 = vadd.f32 %v514, %v972
      %974 = vmatprep.mubr.f32.mxu0 0.0
      %975 = vmatmul.mubr.f32.gmra.mrb[0].mxu0 %v740
      %v976 = vpop.f32.mrb[0].mxu0
      %v977 = vadd.f32 %v519, %v976
      %v978 = vpop.f32.mrb[0].mxu0
      %v979 = vadd.f32 %v519, %v978
      %980 = vmatprep.mubr.f32.mxu0 0.0
      %981 = vmatmul.mubr.f32.gmra.mrb[0].mxu0 %v743
      %v982 = vpop.f32.mrb[0].mxu0
      %v983 = vadd.f32 %v524, %v982
      %v984 = vpop.f32.mrb[0].mxu0
      %v985 = vadd.f32 %v524, %v984
      %986 = vmatprep.mubr.f32.mxu0 0.0
      %987 = vmatmul.mubr.f32.gmra.mrb[0].mxu0 %v746
      %v988 = vpop.f32.mrb[0].mxu0
      %v989 = vadd.f32 %v529, %v988
      %v990 = vpop.f32.mrb[0].mxu0
      %v991 = vadd.f32 %v529, %v990
      %992 = vmatprep.mubr.f32.mxu0 0.0
      %993 = vmatmul.mubr.f32.gmra.mrb[0].mxu0 %v749
      %v994 = vpop.f32.mrb[0].mxu0
      %v995 = vadd.f32 %v534, %v994
      %v996 = vpop.f32.mrb[0].mxu0
      %v997 = vadd.f32 %v534, %v996
      %998 = vmatprep.mubr.f32.mxu0 0.0
      %999 = vmatmul.mubr.f32.gmra.mrb[0].mxu0 %v752
      %v1000 = vpop.f32.mrb[0].mxu0
      %v1001 = vadd.f32 %v539, %v1000
      %v1002 = vpop.f32.mrb[0].mxu0
      %v1003 = vadd.f32 %v539, %v1002
      %1004 = vmatprep.mubr.f32.mxu0 0.0
      %1005 = vmatmul.mubr.f32.gmra.mrb[0].mxu0 %v755
      %v1006 = vpop.f32.mrb[0].mxu0
      %v1007 = vadd.f32 %v544, %v1006
      %v1008 = vpop.f32.mrb[0].mxu0
      %v1009 = vadd.f32 %v544, %v1008
      %1010 = vmatprep.mubr.f32.mxu0 0.0
      %1011 = vmatmul.mubr.f32.gmra.mrb[0].mxu0 %v758
      %v1012 = vpop.f32.mrb[0].mxu0
      %v1013 = vadd.f32 %v549, %v1012
      %v1014 = vpop.f32.mrb[0].mxu0
      %v1015 = vadd.f32 %v549, %v1014
      %1016 = vmatprep.mubr.f32.mxu0 0.0
      %1017 = vmatmul.mubr.f32.gmra.mrb[0].mxu0 %v761
      %v1018 = vpop.f32.mrb[0].mxu0
      %v1019 = vadd.f32 %v554, %v1018
      %v1020 = vpop.f32.mrb[0].mxu0
      %v1021 = vadd.f32 %v554, %v1020
      %1022 = vmatprep.mubr.f32.mxu0 0.0
      %1023 = vmatmul.mubr.f32.gmra.mrb[0].mxu0 %v764
      %v1024 = vpop.f32.mrb[0].mxu0
      %v1025 = vadd.f32 %v559, %v1024
      %v1026 = vpop.f32.mrb[0].mxu0
      %v1027 = vadd.f32 %v559, %v1026
      %1028 = vmatprep.mubr.f32.mxu0 0.0
      %1029 = vmatmul.mubr.f32.gmra.mrb[0].mxu0 %v767
      %v1030 = vpop.f32.mrb[0].mxu0
      %v1031 = vadd.f32 %v564, %v1030
      %v1032 = vpop.f32.mrb[0].mxu0
      %v1033 = vadd.f32 %v564, %v1032
      %1034 = vmatprep.mubr.f32.mxu0 0.0
      %1035 = vmatmul.mubr.f32.gmra.mrb[0].mxu0 %v770
      %v1036 = vpop.f32.mrb[0].mxu0
      %v1037 = vadd.f32 %v569, %v1036
      %v1038 = vpop.f32.mrb[0].mxu0
      %v1039 = vadd.f32 %v569, %v1038
      %1040 = vmatprep.mubr.f32.mxu0 0.0
      %1041 = vmatmul.mubr.f32.gmra.mrb[0].mxu0 %v773
      %v1042 = vpop.f32.mrb[0].mxu0
      %v1043 = vadd.f32 %v574, %v1042
      %v1044 = vpop.f32.mrb[0].mxu0
      %v1045 = vadd.f32 %v574, %v1044
      %1046 = vmatprep.mubr.f32.mxu0 0.0
      %1047 = vmatmul.mubr.f32.gmra.mrb[0].mxu0 %v776
      %v1048 = vpop.f32.mrb[0].mxu0
      %v1049 = vadd.f32 %v579, %v1048
      %v1050 = vpop.f32.mrb[0].mxu0
      %v1051 = vadd.f32 %v579, %v1050
      %1052 = vmatprep.mubr.f32.mxu0 0.0
      %1053 = vmatmul.mubr.f32.gmra.mrb[0].mxu0 %v779
      %v1054 = vpop.f32.mrb[0].mxu0
      %v1055 = vadd.f32 %v584, %v1054
      %v1056 = vpop.f32.mrb[0].mxu0
      %v1057 = vadd.f32 %v584, %v1056
      %1058 = vmatprep.mubr.f32.mxu0 0.0
      %1059 = vmatmul.mubr.f32.gmra.mrb[0].mxu0 %v782
      %v1060 = vpop.f32.mrb[0].mxu0
      %v1061 = vadd.f32 %v589, %v1060
      %v1062 = vpop.f32.mrb[0].mxu0
      %v1063 = vadd.f32 %v589, %v1062
      %1064 = vmatprep.mubr.f32.mxu0 0.0
      %1065 = vmatmul.mubr.f32.gmra.mrb[0].mxu0 %v785
      %v1066 = vpop.f32.mrb[0].mxu0
      %v1067 = vadd.f32 %v594, %v1066
      %v1068 = vpop.f32.mrb[0].mxu0
      %v1069 = vadd.f32 %v594, %v1068
      %1070 = vmatprep.mubr.f32.mxu0 0.0
      %1071 = vmatmul.mubr.f32.gmra.mrb[0].mxu0 %v788
      %v1072 = vpop.f32.mrb[0].mxu0
      %v1073 = vadd.f32 %v599, %v1072
      %v1074 = vpop.f32.mrb[0].mxu0
      %v1075 = vadd.f32 %v599, %v1074
      %1076 = vmatprep.mubr.f32.mxu0 0.0
      %1077 = vmatmul.mubr.f32.gmra.mrb[0].mxu0 %v791
      %v1078 = vpop.f32.mrb[0].mxu0
      %v1079 = vadd.f32 %v604, %v1078
      %v1080 = vpop.f32.mrb[0].mxu0
      %v1081 = vadd.f32 %v604, %v1080
      %1082 = vmatprep.mubr.f32.mxu0 0.0
      %1083 = vmatmul.mubr.f32.gmra.mrb[0].mxu0 %v794
      %v1084 = vpop.f32.mrb[0].mxu0
      %v1085 = vadd.f32 %v609, %v1084
      %v1086 = vpop.f32.mrb[0].mxu0
      %v1087 = vadd.f32 %v609, %v1086
      %1088 = vmatprep.mubr.f32.mxu0 0.0
      %1089 = vmatmul.mubr.f32.gmra.mrb[0].mxu0 %v797
      %v1090 = vpop.f32.mrb[0].mxu0
      %v1091 = vadd.f32 %v614, %v1090
      %v1092 = vpop.f32.mrb[0].mxu0
      %v1093 = vadd.f32 %v614, %v1092
      %1094 = vmatprep.mubr.f32.mxu0 0.0
      %1095 = vmatmul.mubr.f32.gmra.mrb[0].mxu0 %v800
      %v1096 = vpop.f32.mrb[0].mxu0
      %v1097 = vadd.f32 %v619, %v1096
      %v1098 = vpop.f32.mrb[0].mxu0
      %v1099 = vadd.f32 %v619, %v1098
      %1100 = vmatprep.mubr.f32.mxu0 0.0
      %1101 = vmatmul.mubr.f32.gmra.mrb[0].mxu0 %v803
      %v1102 = vpop.f32.mrb[0].mxu0
      %v1103 = vadd.f32 %v624, %v1102
      %v1104 = vpop.f32.mrb[0].mxu0
      %v1105 = vadd.f32 %v624, %v1104
      %1106 = vmatprep.mubr.f32.mxu0 0.0
      %1107 = vmatmul.mubr.f32.gmra.mrb[0].mxu0 %v806
      %v1108 = vpop.f32.mrb[0].mxu0
      %v1109 = vadd.f32 %v629, %v1108
      %v1110 = vpop.f32.mrb[0].mxu0
      %v1111 = vadd.f32 %v629, %v1110
      %1112 = vmatprep.mubr.f32.mxu0 0.0
      %1113 = vmatmul.mubr.f32.gmra.mrb[0].mxu0 %v809
      %v1114 = vpop.f32.mrb[0].mxu0
      %v1115 = vadd.f32 %v634, %v1114
      %v1116 = vpop.f32.mrb[0].mxu0
      %v1117 = vadd.f32 %v634, %v1116
      %1118 = vmatprep.mubr.f32.mxu0 0.0
      %1119 = vmatmul.mubr.f32.gmra.mrb[0].mxu0 %v812
      %v1120 = vpop.f32.mrb[0].mxu0
      %v1121 = vadd.f32 %v639, %v1120
      %v1122 = vpop.f32.mrb[0].mxu0
      %v1123 = vadd.f32 %v639, %v1122
      %1124 = vmatprep.mubr.f32.mxu0 0.0
      %1125 = vmatmul.mubr.f32.gmra.mrb[0].mxu0 %v815
      %v1126 = vpop.f32.mrb[0].mxu0
      %v1127 = vadd.f32 %v644, %v1126
      %v1128 = vpop.f32.mrb[0].mxu0
      %v1129 = vadd.f32 %v644, %v1128
      %1130 = vmatprep.mubr.f32.mxu0 0.0
      %1131 = vmatmul.mubr.f32.gmra.mrb[0].mxu0 %v818
      %v1132 = vpop.f32.mrb[0].mxu0
      %v1133 = vadd.f32 %v649, %v1132
      %v1134 = vpop.f32.mrb[0].mxu0
      %v1135 = vadd.f32 %v649, %v1134
      %1136 = vmatprep.mubr.f32.mxu0 0.0
      %1137 = vmatmul.mubr.f32.gmra.mrb[0].mxu0 %v821
      %v1138 = vpop.f32.mrb[0].mxu0
      %v1139 = vadd.f32 %v654, %v1138
      %v1140 = vpop.f32.mrb[0].mxu0
      %v1141 = vadd.f32 %v654, %v1140
      %1142 = vmatprep.mubr.f32.mxu0 0.0
      %1143 = vmatmul.mubr.f32.gmra.mrb[0].mxu0 %v824
      %v1144 = vpop.f32.mrb[0].mxu0
      %v1145 = vadd.f32 %v659, %v1144
      %v1146 = vpop.f32.mrb[0].mxu0
      %v1147 = vadd.f32 %v659, %v1146
      %1148 = vmatprep.mubr.f32.mxu0 0.0
      %1149 = vmatmul.mubr.f32.gmra.mrb[0].mxu0 %v827
      %v1150 = vpop.f32.mrb[0].mxu0
      %v1151 = vadd.f32 %v664, %v1150
      %v1152 = vpop.f32.mrb[0].mxu0
      %v1153 = vadd.f32 %v664, %v1152
      %1154 = vmatprep.mubr.f32.mxu0 0.0
      %1155 = vmatmul.mubr.f32.gmra.mrb[0].mxu0 %v830
      %v1156 = vpop.f32.mrb[0].mxu0
      %v1157 = vadd.f32 %v669, %v1156
      %v1158 = vpop.f32.mrb[0].mxu0
      %v1159 = vadd.f32 %v669, %v1158
      %1160 = vmatprep.mubr.f32.mxu0 0.0
      %1161 = vmatmul.mubr.f32.gmra.mrb[0].mxu0 %v833
      %v1162 = vpop.f32.mrb[0].mxu0
      %v1163 = vadd.f32 %v674, %v1162
      %v1164 = vpop.f32.mrb[0].mxu0
      %v1165 = vadd.f32 %v674, %v1164
      %1166 = vmatprep.mubr.f32.mxu0 0.0
      %1167 = vmatmul.mubr.f32.gmra.mrb[0].mxu0 %v836
      %v1168 = vpop.f32.mrb[0].mxu0
      %v1169 = vadd.f32 %v679, %v1168
      %v1170 = vpop.f32.mrb[0].mxu0
      %v1171 = vadd.f32 %v679, %v1170
      %1172 = vmatprep.mubr.f32.mxu0 0.0
      %1173 = vmatmul.mubr.f32.gmra.mrb[0].mxu0 %v839
      %v1174 = vpop.f32.mrb[0].mxu0
      %v1175 = vadd.f32 %v684, %v1174
      %v1176 = vpop.f32.mrb[0].mxu0
      %v1177 = vadd.f32 %v684, %v1176
      %1178 = vmatprep.mubr.f32.mxu0 0.0
      %1179 = vmatmul.mubr.f32.gmra.mrb[0].mxu0 %v842
      %v1180 = vpop.f32.mrb[0].mxu0
      %v1181 = vadd.f32 %v689, %v1180
      %v1182 = vpop.f32.mrb[0].mxu0
      %v1183 = vadd.f32 %v689, %v1182
      %1184 = vmatprep.mubr.f32.mxu0 0.0
      %1185 = vmatmul.mubr.f32.gmra.mrb[0].mxu0 %v845
      %v1186 = vpop.f32.mrb[0].mxu0
      %v1187 = vadd.f32 %v694, %v1186
      %v1188 = vpop.f32.mrb[0].mxu0
      %v1189 = vadd.f32 %v694, %v1188
      %1190 = vmatprep.mubr.f32.mxu0 0.0
      %1191 = vmatmul.mubr.f32.gmra.mrb[0].mxu0 %v848
      %v1192 = vpop.f32.mrb[0].mxu0
      %v1193 = vadd.f32 %v699, %v1192
      %v1194 = vpop.f32.mrb[0].mxu0
      %v1195 = vadd.f32 %v699, %v1194
      %1196 = vmatprep.mubr.f32.mxu0 0.0
      %1197 = vmatmul.mubr.f32.gmra.mrb[0].mxu0 %v851
      %v1198 = vpop.f32.mrb[0].mxu0
      %v1199 = vadd.f32 %v704, %v1198
      %v1200 = vpop.f32.mrb[0].mxu0
      %v1201 = vadd.f32 %v704, %v1200
      %1202 = vmatprep.mubr.f32.mxu0 0.0
      %1203 = vmatmul.mubr.f32.gmra.mrb[0].mxu0 %v854
      %v1204 = vpop.f32.mrb[0].mxu0
      %v1205 = vadd.f32 %v709, %v1204
      %v1206 = vpop.f32.mrb[0].mxu0
      %v1207 = vadd.f32 %v709, %v1206
      %1208 = vdwg.mxu0
      %v1209 = vld [vmem:[%s2] sm:$0xff]
      %v1210 = vld [vmem:[%s2 + $0x8] sm:$0xff]
      %v1211 = vld [vmem:[%s2 + $0x10] sm:$0xff]
      %v1212 = vld [vmem:[%s2 + $0x18] sm:$0xff]
      %v1213 = vld [vmem:[%s2 + $0x20] sm:$0xff]
      %v1214 = vld [vmem:[%s2 + $0x28] sm:$0xff]
      %v1215 = vld [vmem:[%s2 + $0x30] sm:$0xff]
      %v1216 = vld [vmem:[%s2 + $0x38] sm:$0xff]
      %v1217 = vld [vmem:[%s2 + $0x40] sm:$0xff]
      %v1218 = vld [vmem:[%s2 + $0x48] sm:$0xff]
      %v1219 = vld [vmem:[%s2 + $0x50] sm:$0xff]
      %v1220 = vld [vmem:[%s2 + $0x58] sm:$0xff]
      %v1221 = vld [vmem:[%s2 + $0x60] sm:$0xff]
      %v1222 = vld [vmem:[%s2 + $0x68] sm:$0xff]
      %v1223 = vld [vmem:[%s2 + $0x70] sm:$0xff]
      %v1224 = vld [vmem:[%s2 + $0x78] sm:$0xff]
      %v1225 = vld [vmem:[%s2 + $0x80] sm:$0xff]
      %v1226 = vld [vmem:[%s2 + $0x88] sm:$0xff]
      %v1227 = vld [vmem:[%s2 + $0x90] sm:$0xff]
      %v1228 = vld [vmem:[%s2 + $0x98] sm:$0xff]
      %v1229 = vld [vmem:[%s2 + $0xa0] sm:$0xff]
      %v1230 = vld [vmem:[%s2 + $0xa8] sm:$0xff]
      %v1231 = vld [vmem:[%s2 + $0xb0] sm:$0xff]
      %v1232 = vld [vmem:[%s2 + $0xb8] sm:$0xff]
      %v1233 = vld [vmem:[%s2 + $0xc0] sm:$0xff]
      %v1234 = vld [vmem:[%s2 + $0xc8] sm:$0xff]
      %v1235 = vld [vmem:[%s2 + $0xd0] sm:$0xff]
      %v1236 = vld [vmem:[%s2 + $0xd8] sm:$0xff]
      %v1237 = vld [vmem:[%s2 + $0xe0] sm:$0xff]
      %v1238 = vld [vmem:[%s2 + $0xe8] sm:$0xff]
      %v1239 = vld [vmem:[%s2 + $0xf0] sm:$0xff]
      %v1240 = vld [vmem:[%s2 + $0xf8] sm:$0xff]
      %1241 = vmatprep.subr.mxu0 %v328
      %1242 = vmatpush1.msra.mxu0 %v327
      %1243 = vmatprep.subr.mxu0 %v330
      %1244 = vmatpush1.msra.mxu0 %v329
      %1245 = vmatprep.subr.mxu0 %v332
      %1246 = vmatpush1.msra.mxu0 %v331
      %1247 = vmatprep.subr.mxu0 %v334
      %1248 = vmatpush1.msra.mxu0 %v333
      %1249 = vmatprep.subr.mxu0 %v336
      %1250 = vmatpush1.msra.mxu0 %v335
      %1251 = vmatprep.subr.mxu0 %v338
      %1252 = vmatpush1.msra.mxu0 %v337
      %1253 = vmatprep.subr.mxu0 %v340
      %1254 = vmatpush1.msra.mxu0 %v339
      %1255 = vmatprep.subr.mxu0 %v342
      %1256 = vmatpush1.msra.mxu0 %v341
      %1257 = vmatprep.subr.mxu0 %v344
      %1258 = vmatpush1.msra.mxu0 %v343
      %1259 = vmatprep.subr.mxu0 %v346
      %1260 = vmatpush1.msra.mxu0 %v345
      %1261 = vmatprep.subr.mxu0 %v348
      %1262 = vmatpush1.msra.mxu0 %v347
      %1263 = vmatprep.subr.mxu0 %v350
      %1264 = vmatpush1.msra.mxu0 %v349
      %1265 = vmatprep.subr.mxu0 %v352
      %1266 = vmatpush1.msra.mxu0 %v351
      %1267 = vmatprep.subr.mxu0 %v354
      %1268 = vmatpush1.msra.mxu0 %v353
      %1269 = vmatprep.subr.mxu0 %v356
      %1270 = vmatpush1.msra.mxu0 %v355
      %1271 = vmatprep.subr.mxu0 %v358
      %1272 = vmatpush1.msra.mxu0 %v357
      %1273 = vmatprep.subr.mxu0 0.0
      %1274 = vmatpush1.msra.mxu0 0.0
      %1275 = vmatprep.subr.mxu0 0.0
      %1276 = vmatpush1.msra.mxu0 0.0
      %1277 = vmatprep.subr.mxu0 0.0
      %1278 = vmatpush1.msra.mxu0 0.0
      %1279 = vmatprep.subr.mxu0 0.0
      %1280 = vmatpush1.msra.mxu0 0.0
      %1281 = vmatprep.subr.mxu0 0.0
      %1282 = vmatpush1.msra.mxu0 0.0
      %1283 = vmatprep.subr.mxu0 0.0
      %1284 = vmatpush1.msra.mxu0 0.0
      %1285 = vmatprep.subr.mxu0 0.0
      %1286 = vmatpush1.msra.mxu0 0.0
      %1287 = vmatprep.subr.mxu0 0.0
      %1288 = vmatpush1.msra.mxu0 0.0
      %1289 = vmatprep.subr.mxu0 0.0
      %1290 = vmatpush1.msra.mxu0 0.0
      %1291 = vmatprep.subr.mxu0 0.0
      %1292 = vmatpush1.msra.mxu0 0.0
      %1293 = vmatprep.subr.mxu0 0.0
      %1294 = vmatpush1.msra.mxu0 0.0
      %1295 = vmatprep.subr.mxu0 0.0
      %1296 = vmatpush1.msra.mxu0 0.0
      %1297 = vmatprep.subr.mxu0 0.0
      %1298 = vmatpush1.msra.mxu0 0.0
      %1299 = vmatprep.subr.mxu0 0.0
      %1300 = vmatpush1.msra.mxu0 0.0
      %1301 = vmatprep.subr.mxu0 0.0
      %1302 = vmatpush1.msra.mxu0 0.0
      %1303 = vmatprep.subr.mxu0 0.0
      %1304 = vmatpush1.msra.mxu0 0.0
      %1305 = vmatprep.mubr.f32.mxu0 0.0
      %1306 = vmatmul.mubr.f32.gmra.mrb[0].mxu0 %v1209
      %v1307 = vpop.f32.mrb[0].mxu0
      %v1308 = vadd.f32 %v923, %v1307
      %v1309 = vpop.f32.mrb[0].mxu0
      %v1310 = vadd.f32 %v925, %v1309
      %1311 = vmatprep.mubr.f32.mxu0 0.0
      %1312 = vmatmul.mubr.f32.gmra.mrb[0].mxu0 %v1210
      %v1313 = vpop.f32.mrb[0].mxu0
      %v1314 = vadd.f32 %v929, %v1313
      %v1315 = vpop.f32.mrb[0].mxu0
      %v1316 = vadd.f32 %v931, %v1315
      %1317 = vmatprep.mubr.f32.mxu0 0.0
      %1318 = vmatmul.mubr.f32.gmra.mrb[0].mxu0 %v1211
      %v1319 = vpop.f32.mrb[0].mxu0
      %v1320 = vadd.f32 %v935, %v1319
      %v1321 = vpop.f32.mrb[0].mxu0
      %v1322 = vadd.f32 %v937, %v1321
      %1323 = vmatprep.mubr.f32.mxu0 0.0
      %1324 = vmatmul.mubr.f32.gmra.mrb[0].mxu0 %v1212
      %v1325 = vpop.f32.mrb[0].mxu0
      %v1326 = vadd.f32 %v941, %v1325
      %v1327 = vpop.f32.mrb[0].mxu0
      %v1328 = vadd.f32 %v943, %v1327
      %1329 = vmatprep.mubr.f32.mxu0 0.0
      %1330 = vmatmul.mubr.f32.gmra.mrb[0].mxu0 %v1213
      %v1331 = vpop.f32.mrb[0].mxu0
      %v1332 = vadd.f32 %v947, %v1331
      %v1333 = vpop.f32.mrb[0].mxu0
      %v1334 = vadd.f32 %v949, %v1333
      %1335 = vmatprep.mubr.f32.mxu0 0.0
      %1336 = vmatmul.mubr.f32.gmra.mrb[0].mxu0 %v1214
      %v1337 = vpop.f32.mrb[0].mxu0
      %v1338 = vadd.f32 %v953, %v1337
      %v1339 = vpop.f32.mrb[0].mxu0
      %v1340 = vadd.f32 %v955, %v1339
      %1341 = vmatprep.mubr.f32.mxu0 0.0
      %1342 = vmatmul.mubr.f32.gmra.mrb[0].mxu0 %v1215
      %v1343 = vpop.f32.mrb[0].mxu0
      %v1344 = vadd.f32 %v959, %v1343
      %v1345 = vpop.f32.mrb[0].mxu0
      %v1346 = vadd.f32 %v961, %v1345
      %1347 = vmatprep.mubr.f32.mxu0 0.0
      %1348 = vmatmul.mubr.f32.gmra.mrb[0].mxu0 %v1216
      %v1349 = vpop.f32.mrb[0].mxu0
      %v1350 = vadd.f32 %v965, %v1349
      %v1351 = vpop.f32.mrb[0].mxu0
      %v1352 = vadd.f32 %v967, %v1351
      %1353 = vmatprep.mubr.f32.mxu0 0.0
      %1354 = vmatmul.mubr.f32.gmra.mrb[0].mxu0 %v1217
      %v1355 = vpop.f32.mrb[0].mxu0
      %v1356 = vadd.f32 %v971, %v1355
      %v1357 = vpop.f32.mrb[0].mxu0
      %v1358 = vadd.f32 %v973, %v1357
      %1359 = vmatprep.mubr.f32.mxu0 0.0
      %1360 = vmatmul.mubr.f32.gmra.mrb[0].mxu0 %v1218
      %v1361 = vpop.f32.mrb[0].mxu0
      %v1362 = vadd.f32 %v977, %v1361
      %v1363 = vpop.f32.mrb[0].mxu0
      %v1364 = vadd.f32 %v979, %v1363
      %1365 = vmatprep.mubr.f32.mxu0 0.0
      %1366 = vmatmul.mubr.f32.gmra.mrb[0].mxu0 %v1219
      %v1367 = vpop.f32.mrb[0].mxu0
      %v1368 = vadd.f32 %v983, %v1367
      %v1369 = vpop.f32.mrb[0].mxu0
      %v1370 = vadd.f32 %v985, %v1369
      %1371 = vmatprep.mubr.f32.mxu0 0.0
      %1372 = vmatmul.mubr.f32.gmra.mrb[0].mxu0 %v1220
      %v1373 = vpop.f32.mrb[0].mxu0
      %v1374 = vadd.f32 %v989, %v1373
      %v1375 = vpop.f32.mrb[0].mxu0
      %v1376 = vadd.f32 %v991, %v1375
      %1377 = vmatprep.mubr.f32.mxu0 0.0
      %1378 = vmatmul.mubr.f32.gmra.mrb[0].mxu0 %v1221
      %v1379 = vpop.f32.mrb[0].mxu0
      %v1380 = vadd.f32 %v995, %v1379
      %v1381 = vpop.f32.mrb[0].mxu0
      %v1382 = vadd.f32 %v997, %v1381
      %1383 = vmatprep.mubr.f32.mxu0 0.0
      %1384 = vmatmul.mubr.f32.gmra.mrb[0].mxu0 %v1222
      %v1385 = vpop.f32.mrb[0].mxu0
      %v1386 = vadd.f32 %v1001, %v1385
      %v1387 = vpop.f32.mrb[0].mxu0
      %v1388 = vadd.f32 %v1003, %v1387
      %1389 = vmatprep.mubr.f32.mxu0 0.0
      %1390 = vmatmul.mubr.f32.gmra.mrb[0].mxu0 %v1223
      %v1391 = vpop.f32.mrb[0].mxu0
      %v1392 = vadd.f32 %v1007, %v1391
      %v1393 = vpop.f32.mrb[0].mxu0
      %v1394 = vadd.f32 %v1009, %v1393
      %1395 = vmatprep.mubr.f32.mxu0 0.0
      %1396 = vmatmul.mubr.f32.gmra.mrb[0].mxu0 %v1224
      %v1397 = vpop.f32.mrb[0].mxu0
      %v1398 = vadd.f32 %v1013, %v1397
      %v1399 = vpop.f32.mrb[0].mxu0
      %v1400 = vadd.f32 %v1015, %v1399
      %1401 = vmatprep.mubr.f32.mxu0 0.0
      %1402 = vmatmul.mubr.f32.gmra.mrb[0].mxu0 %v1225
      %v1403 = vpop.f32.mrb[0].mxu0
      %v1404 = vadd.f32 %v1019, %v1403
      %v1405 = vpop.f32.mrb[0].mxu0
      %v1406 = vadd.f32 %v1021, %v1405
      %1407 = vmatprep.mubr.f32.mxu0 0.0
      %1408 = vmatmul.mubr.f32.gmra.mrb[0].mxu0 %v1226
      %v1409 = vpop.f32.mrb[0].mxu0
      %v1410 = vadd.f32 %v1025, %v1409
      %v1411 = vpop.f32.mrb[0].mxu0
      %v1412 = vadd.f32 %v1027, %v1411
      %1413 = vmatprep.mubr.f32.mxu0 0.0
      %1414 = vmatmul.mubr.f32.gmra.mrb[0].mxu0 %v1227
      %v1415 = vpop.f32.mrb[0].mxu0
      %v1416 = vadd.f32 %v1031, %v1415
      %v1417 = vpop.f32.mrb[0].mxu0
      %v1418 = vadd.f32 %v1033, %v1417
      %1419 = vmatprep.mubr.f32.mxu0 0.0
      %1420 = vmatmul.mubr.f32.gmra.mrb[0].mxu0 %v1228
      %v1421 = vpop.f32.mrb[0].mxu0
      %v1422 = vadd.f32 %v1037, %v1421
      %v1423 = vpop.f32.mrb[0].mxu0
      %v1424 = vadd.f32 %v1039, %v1423
      %1425 = vmatprep.mubr.f32.mxu0 0.0
      %1426 = vmatmul.mubr.f32.gmra.mrb[0].mxu0 %v1229
      %v1427 = vpop.f32.mrb[0].mxu0
      %v1428 = vadd.f32 %v1043, %v1427
      %v1429 = vpop.f32.mrb[0].mxu0
      %v1430 = vadd.f32 %v1045, %v1429
      %1431 = vmatprep.mubr.f32.mxu0 0.0
      %1432 = vmatmul.mubr.f32.gmra.mrb[0].mxu0 %v1230
      %v1433 = vpop.f32.mrb[0].mxu0
      %v1434 = vadd.f32 %v1049, %v1433
      %v1435 = vpop.f32.mrb[0].mxu0
      %v1436 = vadd.f32 %v1051, %v1435
      %1437 = vmatprep.mubr.f32.mxu0 0.0
      %1438 = vmatmul.mubr.f32.gmra.mrb[0].mxu0 %v1231
      %v1439 = vpop.f32.mrb[0].mxu0
      %v1440 = vadd.f32 %v1055, %v1439
      %v1441 = vpop.f32.mrb[0].mxu0
      %v1442 = vadd.f32 %v1057, %v1441
      %1443 = vmatprep.mubr.f32.mxu0 0.0
      %1444 = vmatmul.mubr.f32.gmra.mrb[0].mxu0 %v1232
      %v1445 = vpop.f32.mrb[0].mxu0
      %v1446 = vadd.f32 %v1061, %v1445
      %v1447 = vpop.f32.mrb[0].mxu0
      %v1448 = vadd.f32 %v1063, %v1447
      %1449 = vmatprep.mubr.f32.mxu0 0.0
      %1450 = vmatmul.mubr.f32.gmra.mrb[0].mxu0 %v1233
      %v1451 = vpop.f32.mrb[0].mxu0
      %v1452 = vadd.f32 %v1067, %v1451
      %v1453 = vpop.f32.mrb[0].mxu0
      %v1454 = vadd.f32 %v1069, %v1453
      %1455 = vmatprep.mubr.f32.mxu0 0.0
      %1456 = vmatmul.mubr.f32.gmra.mrb[0].mxu0 %v1234
      %v1457 = vpop.f32.mrb[0].mxu0
      %v1458 = vadd.f32 %v1073, %v1457
      %v1459 = vpop.f32.mrb[0].mxu0
      %v1460 = vadd.f32 %v1075, %v1459
      %1461 = vmatprep.mubr.f32.mxu0 0.0
      %1462 = vmatmul.mubr.f32.gmra.mrb[0].mxu0 %v1235
      %v1463 = vpop.f32.mrb[0].mxu0
      %v1464 = vadd.f32 %v1079, %v1463
      %v1465 = vpop.f32.mrb[0].mxu0
      %v1466 = vadd.f32 %v1081, %v1465
      %1467 = vmatprep.mubr.f32.mxu0 0.0
      %1468 = vmatmul.mubr.f32.gmra.mrb[0].mxu0 %v1236
      %v1469 = vpop.f32.mrb[0].mxu0
      %v1470 = vadd.f32 %v1085, %v1469
      %v1471 = vpop.f32.mrb[0].mxu0
      %v1472 = vadd.f32 %v1087, %v1471
      %1473 = vmatprep.mubr.f32.mxu0 0.0
      %1474 = vmatmul.mubr.f32.gmra.mrb[0].mxu0 %v1237
      %v1475 = vpop.f32.mrb[0].mxu0
      %v1476 = vadd.f32 %v1091, %v1475
      %v1477 = vpop.f32.mrb[0].mxu0
      %v1478 = vadd.f32 %v1093, %v1477
      %1479 = vmatprep.mubr.f32.mxu0 0.0
      %1480 = vmatmul.mubr.f32.gmra.mrb[0].mxu0 %v1238
      %v1481 = vpop.f32.mrb[0].mxu0
      %v1482 = vadd.f32 %v1097, %v1481
      %v1483 = vpop.f32.mrb[0].mxu0
      %v1484 = vadd.f32 %v1099, %v1483
      %1485 = vmatprep.mubr.f32.mxu0 0.0
      %1486 = vmatmul.mubr.f32.gmra.mrb[0].mxu0 %v1239
      %v1487 = vpop.f32.mrb[0].mxu0
      %v1488 = vadd.f32 %v1103, %v1487
      %v1489 = vpop.f32.mrb[0].mxu0
      %v1490 = vadd.f32 %v1105, %v1489
      %1491 = vmatprep.mubr.f32.mxu0 0.0
      %1492 = vmatmul.mubr.f32.gmra.mrb[0].mxu0 %v1240
      %v1493 = vpop.f32.mrb[0].mxu0
      %v1494 = vadd.f32 %v1109, %v1493
      %v1495 = vpop.f32.mrb[0].mxu0
      %v1496 = vadd.f32 %v1111, %v1495
      %1497 = vdwg.mxu0
      %v1498 = vxor.u32 %v1308, 2147483648
      %v1499 = vxor.u32 %v1310, 2147483648
      %v1500 = vxor.u32 %v1314, 2147483648
      %v1501 = vxor.u32 %v1316, 2147483648
      %v1502 = vxor.u32 %v1320, 2147483648
      %v1503 = vxor.u32 %v1322, 2147483648
      %v1504 = vxor.u32 %v1326, 2147483648
      %v1505 = vxor.u32 %v1328, 2147483648
      %v1506 = vxor.u32 %v1332, 2147483648
      %v1507 = vxor.u32 %v1334, 2147483648
      %v1508 = vxor.u32 %v1338, 2147483648
      %v1509 = vxor.u32 %v1340, 2147483648
      %v1510 = vxor.u32 %v1344, 2147483648
      %v1511 = vxor.u32 %v1346, 2147483648
      %v1512 = vxor.u32 %v1350, 2147483648
      %v1513 = vxor.u32 %v1352, 2147483648
      %v1514 = vxor.u32 %v1356, 2147483648
      %v1515 = vxor.u32 %v1358, 2147483648
      %v1516 = vxor.u32 %v1362, 2147483648
      %v1517 = vxor.u32 %v1364, 2147483648
      %v1518 = vxor.u32 %v1368, 2147483648
      %v1519 = vxor.u32 %v1370, 2147483648
      %v1520 = vxor.u32 %v1374, 2147483648
      %v1521 = vxor.u32 %v1376, 2147483648
      %v1522 = vxor.u32 %v1380, 2147483648
      %v1523 = vxor.u32 %v1382, 2147483648
      %v1524 = vxor.u32 %v1386, 2147483648
      %v1525 = vxor.u32 %v1388, 2147483648
      %v1526 = vxor.u32 %v1392, 2147483648
      %v1527 = vxor.u32 %v1394, 2147483648
      %v1528 = vxor.u32 %v1398, 2147483648
      %v1529 = vxor.u32 %v1400, 2147483648
      %v1530 = vxor.u32 %v1404, 2147483648
      %v1531 = vxor.u32 %v1406, 2147483648
      %v1532 = vxor.u32 %v1410, 2147483648
      %v1533 = vxor.u32 %v1412, 2147483648
      %v1534 = vxor.u32 %v1416, 2147483648
      %v1535 = vxor.u32 %v1418, 2147483648
      %v1536 = vxor.u32 %v1422, 2147483648
      %v1537 = vxor.u32 %v1424, 2147483648
      %v1538 = vxor.u32 %v1428, 2147483648
      %v1539 = vxor.u32 %v1430, 2147483648
      %v1540 = vxor.u32 %v1434, 2147483648
      %v1541 = vxor.u32 %v1436, 2147483648
      %v1542 = vxor.u32 %v1440, 2147483648
      %v1543 = vxor.u32 %v1442, 2147483648
      %v1544 = vxor.u32 %v1446, 2147483648
      %v1545 = vxor.u32 %v1448, 2147483648
      %v1546 = vxor.u32 %v1452, 2147483648
      %v1547 = vxor.u32 %v1454, 2147483648
      %v1548 = vxor.u32 %v1458, 2147483648
      %v1549 = vxor.u32 %v1460, 2147483648
      %v1550 = vxor.u32 %v1464, 2147483648
      %v1551 = vxor.u32 %v1466, 2147483648
      %v1552 = vxor.u32 %v1470, 2147483648
      %v1553 = vxor.u32 %v1472, 2147483648
      %v1554 = vxor.u32 %v1476, 2147483648
      %v1555 = vxor.u32 %v1478, 2147483648
      %v1556 = vxor.u32 %v1482, 2147483648
      %v1557 = vxor.u32 %v1484, 2147483648
      %v1558 = vxor.u32 %v1488, 2147483648
      %v1559 = vxor.u32 %v1490, 2147483648
      %v1560 = vxor.u32 %v1494, 2147483648
      %v1561 = vxor.u32 %v1496, 2147483648
      %v1562 = vmul.f32 %v1498, 1.442695
      %v1563 = vpow.pop %v1562
      %v1564 = vmul.f32 %v1499, 1.442695
      %v1565 = vpow.pop %v1564
      %v1566 = vmul.f32 %v1500, 1.442695
      %v1567 = vpow.pop %v1566
      %v1568 = vmul.f32 %v1501, 1.442695
      %v1569 = vpow.pop %v1568
      %v1570 = vmul.f32 %v1502, 1.442695
      %v1571 = vpow.pop %v1570
      %v1572 = vmul.f32 %v1503, 1.442695
      %v1573 = vpow.pop %v1572
      %v1574 = vmul.f32 %v1504, 1.442695
      %v1575 = vpow.pop %v1574
      %v1576 = vmul.f32 %v1505, 1.442695
      %v1577 = vpow.pop %v1576
      %v1578 = vmul.f32 %v1506, 1.442695
      %v1579 = vpow.pop %v1578
      %v1580 = vmul.f32 %v1507, 1.442695
      %v1581 = vpow.pop %v1580
      %v1582 = vmul.f32 %v1508, 1.442695
      %v1583 = vpow.pop %v1582
      %v1584 = vmul.f32 %v1509, 1.442695
      %v1585 = vpow.pop %v1584
      %v1586 = vmul.f32 %v1510, 1.442695
      %v1587 = vpow.pop %v1586
      %v1588 = vmul.f32 %v1511, 1.442695
      %v1589 = vpow.pop %v1588
      %v1590 = vmul.f32 %v1512, 1.442695
      %v1591 = vpow.pop %v1590
      %v1592 = vmul.f32 %v1513, 1.442695
      %v1593 = vpow.pop %v1592
      %v1594 = vmul.f32 %v1514, 1.442695
      %v1595 = vpow.pop %v1594
      %v1596 = vmul.f32 %v1515, 1.442695
      %v1597 = vpow.pop %v1596
      %v1598 = vmul.f32 %v1516, 1.442695
      %v1599 = vpow.pop %v1598
      %v1600 = vmul.f32 %v1517, 1.442695
      %v1601 = vpow.pop %v1600
      %v1602 = vmul.f32 %v1518, 1.442695
      %v1603 = vpow.pop %v1602
      %v1604 = vmul.f32 %v1519, 1.442695
      %v1605 = vpow.pop %v1604
      %v1606 = vmul.f32 %v1520, 1.442695
      %v1607 = vpow.pop %v1606
      %v1608 = vmul.f32 %v1521, 1.442695
      %v1609 = vpow.pop %v1608
      %v1610 = vmul.f32 %v1522, 1.442695
      %v1611 = vpow.pop %v1610
      %v1612 = vmul.f32 %v1523, 1.442695
      %v1613 = vpow.pop %v1612
      %v1614 = vmul.f32 %v1524, 1.442695
      %v1615 = vpow.pop %v1614
      %v1616 = vmul.f32 %v1525, 1.442695
      %v1617 = vpow.pop %v1616
      %v1618 = vmul.f32 %v1526, 1.442695
      %v1619 = vpow.pop %v1618
      %v1620 = vmul.f32 %v1527, 1.442695
      %v1621 = vpow.pop %v1620
      %v1622 = vmul.f32 %v1528, 1.442695
      %v1623 = vpow.pop %v1622
      %v1624 = vmul.f32 %v1529, 1.442695
      %v1625 = vpow.pop %v1624
      %v1626 = vmul.f32 %v1530, 1.442695
      %v1627 = vpow.pop %v1626
      %v1628 = vmul.f32 %v1531, 1.442695
      %v1629 = vpow.pop %v1628
      %v1630 = vmul.f32 %v1532, 1.442695
      %v1631 = vpow.pop %v1630
      %v1632 = vmul.f32 %v1533, 1.442695
      %v1633 = vpow.pop %v1632
      %v1634 = vmul.f32 %v1534, 1.442695
      %v1635 = vpow.pop %v1634
      %v1636 = vmul.f32 %v1535, 1.442695
      %v1637 = vpow.pop %v1636
      %v1638 = vmul.f32 %v1536, 1.442695
      %v1639 = vpow.pop %v1638
      %v1640 = vmul.f32 %v1537, 1.442695
      %v1641 = vpow.pop %v1640
      %v1642 = vmul.f32 %v1538, 1.442695
      %v1643 = vpow.pop %v1642
      %v1644 = vmul.f32 %v1539, 1.442695
      %v1645 = vpow.pop %v1644
      %v1646 = vmul.f32 %v1540, 1.442695
      %v1647 = vpow.pop %v1646
      %v1648 = vmul.f32 %v1541, 1.442695
      %v1649 = vpow.pop %v1648
      %v1650 = vmul.f32 %v1542, 1.442695
      %v1651 = vpow.pop %v1650
      %v1652 = vmul.f32 %v1543, 1.442695
      %v1653 = vpow.pop %v1652
      %v1654 = vmul.f32 %v1544, 1.442695
      %v1655 = vpow.pop %v1654
      %v1656 = vmul.f32 %v1545, 1.442695
      %v1657 = vpow.pop %v1656
      %v1658 = vmul.f32 %v1546, 1.442695
      %v1659 = vpow.pop %v1658
      %v1660 = vmul.f32 %v1547, 1.442695
      %v1661 = vpow.pop %v1660
      %v1662 = vmul.f32 %v1548, 1.442695
      %v1663 = vpow.pop %v1662
      %v1664 = vmul.f32 %v1549, 1.442695
      %v1665 = vpow.pop %v1664
      %v1666 = vmul.f32 %v1550, 1.442695
      %v1667 = vpow.pop %v1666
      %v1668 = vmul.f32 %v1551, 1.442695
      %v1669 = vpow.pop %v1668
      %v1670 = vmul.f32 %v1552, 1.442695
      %v1671 = vpow.pop %v1670
      %v1672 = vmul.f32 %v1553, 1.442695
      %v1673 = vpow.pop %v1672
      %v1674 = vmul.f32 %v1554, 1.442695
      %v1675 = vpow.pop %v1674
      %v1676 = vmul.f32 %v1555, 1.442695
      %v1677 = vpow.pop %v1676
      %v1678 = vmul.f32 %v1556, 1.442695
      %v1679 = vpow.pop %v1678
      %v1680 = vmul.f32 %v1557, 1.442695
      %v1681 = vpow.pop %v1680
      %v1682 = vmul.f32 %v1558, 1.442695
      %v1683 = vpow.pop %v1682
      %v1684 = vmul.f32 %v1559, 1.442695
      %v1685 = vpow.pop %v1684
      %v1686 = vmul.f32 %v1560, 1.442695
      %v1687 = vpow.pop %v1686
      %v1688 = vmul.f32 %v1561, 1.442695
      %v1689 = vpow.pop %v1688
      %v1690 = vadd.f32 %v1563, 1.0
      %v1691 = vadd.f32 %v1565, 1.0
      %v1692 = vadd.f32 %v1567, 1.0
      %v1693 = vadd.f32 %v1569, 1.0
      %v1694 = vadd.f32 %v1571, 1.0
      %v1695 = vadd.f32 %v1573, 1.0
      %v1696 = vadd.f32 %v1575, 1.0
      %v1697 = vadd.f32 %v1577, 1.0
      %v1698 = vadd.f32 %v1579, 1.0
      %v1699 = vadd.f32 %v1581, 1.0
      %v1700 = vadd.f32 %v1583, 1.0
      %v1701 = vadd.f32 %v1585, 1.0
      %v1702 = vadd.f32 %v1587, 1.0
      %v1703 = vadd.f32 %v1589, 1.0
      %v1704 = vadd.f32 %v1591, 1.0
      %v1705 = vadd.f32 %v1593, 1.0
      %v1706 = vadd.f32 %v1595, 1.0
      %v1707 = vadd.f32 %v1597, 1.0
      %v1708 = vadd.f32 %v1599, 1.0
      %v1709 = vadd.f32 %v1601, 1.0
      %v1710 = vadd.f32 %v1603, 1.0
      %v1711 = vadd.f32 %v1605, 1.0
      %v1712 = vadd.f32 %v1607, 1.0
      %v1713 = vadd.f32 %v1609, 1.0
      %v1714 = vadd.f32 %v1611, 1.0
      %v1715 = vadd.f32 %v1613, 1.0
      %v1716 = vadd.f32 %v1615, 1.0
      %v1717 = vadd.f32 %v1617, 1.0
      %v1718 = vadd.f32 %v1619, 1.0
      %v1719 = vadd.f32 %v1621, 1.0
      %v1720 = vadd.f32 %v1623, 1.0
      %v1721 = vadd.f32 %v1625, 1.0
      %v1722 = vadd.f32 %v1627, 1.0
      %v1723 = vadd.f32 %v1629, 1.0
      %v1724 = vadd.f32 %v1631, 1.0
      %v1725 = vadd.f32 %v1633, 1.0
      %v1726 = vadd.f32 %v1635, 1.0
      %v1727 = vadd.f32 %v1637, 1.0
      %v1728 = vadd.f32 %v1639, 1.0
      %v1729 = vadd.f32 %v1641, 1.0
      %v1730 = vadd.f32 %v1643, 1.0
      %v1731 = vadd.f32 %v1645, 1.0
      %v1732 = vadd.f32 %v1647, 1.0
      %v1733 = vadd.f32 %v1649, 1.0
      %v1734 = vadd.f32 %v1651, 1.0
      %v1735 = vadd.f32 %v1653, 1.0
      %v1736 = vadd.f32 %v1655, 1.0
      %v1737 = vadd.f32 %v1657, 1.0
      %v1738 = vadd.f32 %v1659, 1.0
      %v1739 = vadd.f32 %v1661, 1.0
      %v1740 = vadd.f32 %v1663, 1.0
      %v1741 = vadd.f32 %v1665, 1.0
      %v1742 = vadd.f32 %v1667, 1.0
      %v1743 = vadd.f32 %v1669, 1.0
      %v1744 = vadd.f32 %v1671, 1.0
      %v1745 = vadd.f32 %v1673, 1.0
      %v1746 = vadd.f32 %v1675, 1.0
      %v1747 = vadd.f32 %v1677, 1.0
      %v1748 = vadd.f32 %v1679, 1.0
      %v1749 = vadd.f32 %v1681, 1.0
      %v1750 = vadd.f32 %v1683, 1.0
      %v1751 = vadd.f32 %v1685, 1.0
      %v1752 = vadd.f32 %v1687, 1.0
      %v1753 = vadd.f32 %v1689, 1.0
      %v1754 = vrcp.pop %v1690
      %v1755 = vmul.f32 1.0, %v1754
      %v1756 = vrcp.pop %v1691
      %v1757 = vmul.f32 1.0, %v1756
      %v1758 = vrcp.pop %v1692
      %v1759 = vmul.f32 1.0, %v1758
      %v1760 = vrcp.pop %v1693
      %v1761 = vmul.f32 1.0, %v1760
      %v1762 = vrcp.pop %v1694
      %v1763 = vmul.f32 1.0, %v1762
      %v1764 = vrcp.pop %v1695
      %v1765 = vmul.f32 1.0, %v1764
      %v1766 = vrcp.pop %v1696
      %v1767 = vmul.f32 1.0, %v1766
      %v1768 = vrcp.pop %v1697
      %v1769 = vmul.f32 1.0, %v1768
      %v1770 = vrcp.pop %v1698
      %v1771 = vmul.f32 1.0, %v1770
      %v1772 = vrcp.pop %v1699
      %v1773 = vmul.f32 1.0, %v1772
      %v1774 = vrcp.pop %v1700
      %v1775 = vmul.f32 1.0, %v1774
      %v1776 = vrcp.pop %v1701
      %v1777 = vmul.f32 1.0, %v1776
      %v1778 = vrcp.pop %v1702
      %v1779 = vmul.f32 1.0, %v1778
      %v1780 = vrcp.pop %v1703
      %v1781 = vmul.f32 1.0, %v1780
      %v1782 = vrcp.pop %v1704
      %v1783 = vmul.f32 1.0, %v1782
      %v1784 = vrcp.pop %v1705
      %v1785 = vmul.f32 1.0, %v1784
      %v1786 = vrcp.pop %v1706
      %v1787 = vmul.f32 1.0, %v1786
      %v1788 = vrcp.pop %v1707
      %v1789 = vmul.f32 1.0, %v1788
      %v1790 = vrcp.pop %v1708
      %v1791 = vmul.f32 1.0, %v1790
      %v1792 = vrcp.pop %v1709
      %v1793 = vmul.f32 1.0, %v1792
      %v1794 = vrcp.pop %v1710
      %v1795 = vmul.f32 1.0, %v1794
      %v1796 = vrcp.pop %v1711
      %v1797 = vmul.f32 1.0, %v1796
      %v1798 = vrcp.pop %v1712
      %v1799 = vmul.f32 1.0, %v1798
      %v1800 = vrcp.pop %v1713
      %v1801 = vmul.f32 1.0, %v1800
      %v1802 = vrcp.pop %v1714
      %v1803 = vmul.f32 1.0, %v1802
      %v1804 = vrcp.pop %v1715
      %v1805 = vmul.f32 1.0, %v1804
      %v1806 = vrcp.pop %v1716
      %v1807 = vmul.f32 1.0, %v1806
      %v1808 = vrcp.pop %v1717
      %v1809 = vmul.f32 1.0, %v1808
      %v1810 = vrcp.pop %v1718
      %v1811 = vmul.f32 1.0, %v1810
      %v1812 = vrcp.pop %v1719
      %v1813 = vmul.f32 1.0, %v1812
      %v1814 = vrcp.pop %v1720
      %v1815 = vmul.f32 1.0, %v1814
      %v1816 = vrcp.pop %v1721
      %v1817 = vmul.f32 1.0, %v1816
      %v1818 = vrcp.pop %v1722
      %v1819 = vmul.f32 1.0, %v1818
      %v1820 = vrcp.pop %v1723
      %v1821 = vmul.f32 1.0, %v1820
      %v1822 = vrcp.pop %v1724
      %v1823 = vmul.f32 1.0, %v1822
      %v1824 = vrcp.pop %v1725
      %v1825 = vmul.f32 1.0, %v1824
      %v1826 = vrcp.pop %v1726
      %v1827 = vmul.f32 1.0, %v1826
      %v1828 = vrcp.pop %v1727
      %v1829 = vmul.f32 1.0, %v1828
      %v1830 = vrcp.pop %v1728
      %v1831 = vmul.f32 1.0, %v1830
      %v1832 = vrcp.pop %v1729
      %v1833 = vmul.f32 1.0, %v1832
      %v1834 = vrcp.pop %v1730
      %v1835 = vmul.f32 1.0, %v1834
      %v1836 = vrcp.pop %v1731
      %v1837 = vmul.f32 1.0, %v1836
      %v1838 = vrcp.pop %v1732
      %v1839 = vmul.f32 1.0, %v1838
      %v1840 = vrcp.pop %v1733
      %v1841 = vmul.f32 1.0, %v1840
      %v1842 = vrcp.pop %v1734
      %v1843 = vmul.f32 1.0, %v1842
      %v1844 = vrcp.pop %v1735
      %v1845 = vmul.f32 1.0, %v1844
      %v1846 = vrcp.pop %v1736
      %v1847 = vmul.f32 1.0, %v1846
      %v1848 = vrcp.pop %v1737
      %v1849 = vmul.f32 1.0, %v1848
      %v1850 = vrcp.pop %v1738
      %v1851 = vmul.f32 1.0, %v1850
      %v1852 = vrcp.pop %v1739
      %v1853 = vmul.f32 1.0, %v1852
      %v1854 = vrcp.pop %v1740
      %v1855 = vmul.f32 1.0, %v1854
      %v1856 = vrcp.pop %v1741
      %v1857 = vmul.f32 1.0, %v1856
      %v1858 = vrcp.pop %v1742
      %v1859 = vmul.f32 1.0, %v1858
      %v1860 = vrcp.pop %v1743
      %v1861 = vmul.f32 1.0, %v1860
      %v1862 = vrcp.pop %v1744
      %v1863 = vmul.f32 1.0, %v1862
      %v1864 = vrcp.pop %v1745
      %v1865 = vmul.f32 1.0, %v1864
      %v1866 = vrcp.pop %v1746
      %v1867 = vmul.f32 1.0, %v1866
      %v1868 = vrcp.pop %v1747
      %v1869 = vmul.f32 1.0, %v1868
      %v1870 = vrcp.pop %v1748
      %v1871 = vmul.f32 1.0, %v1870
      %v1872 = vrcp.pop %v1749
      %v1873 = vmul.f32 1.0, %v1872
      %v1874 = vrcp.pop %v1750
      %v1875 = vmul.f32 1.0, %v1874
      %v1876 = vrcp.pop %v1751
      %v1877 = vmul.f32 1.0, %v1876
      %v1878 = vrcp.pop %v1752
      %v1879 = vmul.f32 1.0, %v1878
      %v1880 = vrcp.pop %v1753
      %v1881 = vmul.f32 1.0, %v1880
      %v1882 = vmul.f32 %v1819, %v327
      %v1883 = vmul.f32 %v1821, %v328
      %v1884 = vmul.f32 %v1823, %v329
      %v1885 = vmul.f32 %v1825, %v330
      %v1886 = vmul.f32 %v1827, %v331
      %v1887 = vmul.f32 %v1829, %v332
      %v1888 = vmul.f32 %v1831, %v333
      %v1889 = vmul.f32 %v1833, %v334
      %v1890 = vmul.f32 %v1835, %v335
      %v1891 = vmul.f32 %v1837, %v336
      %v1892 = vmul.f32 %v1839, %v337
      %v1893 = vmul.f32 %v1841, %v338
      %v1894 = vmul.f32 %v1843, %v339
      %v1895 = vmul.f32 %v1845, %v340
      %v1896 = vmul.f32 %v1847, %v341
      %v1897 = vmul.f32 %v1849, %v342
      %v1898 = vmul.f32 %v1851, %v343
      %v1899 = vmul.f32 %v1853, %v344
      %v1900 = vmul.f32 %v1855, %v345
      %v1901 = vmul.f32 %v1857, %v346
      %v1902 = vmul.f32 %v1859, %v347
      %v1903 = vmul.f32 %v1861, %v348
      %v1904 = vmul.f32 %v1863, %v349
      %v1905 = vmul.f32 %v1865, %v350
      %v1906 = vmul.f32 %v1867, %v351
      %v1907 = vmul.f32 %v1869, %v352
      %v1908 = vmul.f32 %v1871, %v353
      %v1909 = vmul.f32 %v1873, %v354
      %v1910 = vmul.f32 %v1875, %v355
      %v1911 = vmul.f32 %v1877, %v356
      %v1912 = vmul.f32 %v1879, %v357
      %v1913 = vmul.f32 %v1881, %v358
      %v1914 = vld [vmem:[%s3] sm:$0xff]
      %v1915 = vld [vmem:[%s3 + $0x8] sm:$0xff]
      %v1916 = vld [vmem:[%s3 + $0x10] sm:$0xff]
      %v1917 = vld [vmem:[%s3 + $0x18] sm:$0xff]
      %v1918 = vld [vmem:[%s3 + $0x20] sm:$0xff]
      %v1919 = vld [vmem:[%s3 + $0x28] sm:$0xff]
      %v1920 = vld [vmem:[%s3 + $0x30] sm:$0xff]
      %v1921 = vld [vmem:[%s3 + $0x38] sm:$0xff]
      %v1922 = vld [vmem:[%s3 + $0x40] sm:$0xff]
      %v1923 = vld [vmem:[%s3 + $0x48] sm:$0xff]
      %v1924 = vld [vmem:[%s3 + $0x50] sm:$0xff]
      %v1925 = vld [vmem:[%s3 + $0x58] sm:$0xff]
      %v1926 = vld [vmem:[%s3 + $0x60] sm:$0xff]
      %v1927 = vld [vmem:[%s3 + $0x68] sm:$0xff]
      %v1928 = vld [vmem:[%s3 + $0x70] sm:$0xff]
      %v1929 = vld [vmem:[%s3 + $0x78] sm:$0xff]
      %1930 = vmatprep.subr.mxu0 %v1883
      %1931 = vmatpush1.msra.mxu0 %v1882
      %1932 = vmatprep.subr.mxu0 %v1885
      %1933 = vmatpush1.msra.mxu0 %v1884
      %1934 = vmatprep.subr.mxu0 %v1887
      %1935 = vmatpush1.msra.mxu0 %v1886
      %1936 = vmatprep.subr.mxu0 %v1889
      %1937 = vmatpush1.msra.mxu0 %v1888
      %1938 = vmatprep.subr.mxu0 %v1891
      %1939 = vmatpush1.msra.mxu0 %v1890
      %1940 = vmatprep.subr.mxu0 %v1893
      %1941 = vmatpush1.msra.mxu0 %v1892
      %1942 = vmatprep.subr.mxu0 %v1895
      %1943 = vmatpush1.msra.mxu0 %v1894
      %1944 = vmatprep.subr.mxu0 %v1897
      %1945 = vmatpush1.msra.mxu0 %v1896
      %1946 = vmatprep.subr.mxu0 %v1899
      %1947 = vmatpush1.msra.mxu0 %v1898
      %1948 = vmatprep.subr.mxu0 %v1901
      %1949 = vmatpush1.msra.mxu0 %v1900
      %1950 = vmatprep.subr.mxu0 %v1903
      %1951 = vmatpush1.msra.mxu0 %v1902
      %1952 = vmatprep.subr.mxu0 %v1905
      %1953 = vmatpush1.msra.mxu0 %v1904
      %1954 = vmatprep.subr.mxu0 %v1907
      %1955 = vmatpush1.msra.mxu0 %v1906
      %1956 = vmatprep.subr.mxu0 %v1909
      %1957 = vmatpush1.msra.mxu0 %v1908
      %1958 = vmatprep.subr.mxu0 %v1911
      %1959 = vmatpush1.msra.mxu0 %v1910
      %1960 = vmatprep.subr.mxu0 %v1913
      %1961 = vmatpush1.msra.mxu0 %v1912
      %1962 = vmatprep.subr.mxu0 0.0
      %1963 = vmatpush1.msra.mxu0 0.0
      %1964 = vmatprep.subr.mxu0 0.0
      %1965 = vmatpush1.msra.mxu0 0.0
      %1966 = vmatprep.subr.mxu0 0.0
      %1967 = vmatpush1.msra.mxu0 0.0
      %1968 = vmatprep.subr.mxu0 0.0
      %1969 = vmatpush1.msra.mxu0 0.0
      %1970 = vmatprep.subr.mxu0 0.0
      %1971 = vmatpush1.msra.mxu0 0.0
      %1972 = vmatprep.subr.mxu0 0.0
      %1973 = vmatpush1.msra.mxu0 0.0
      %1974 = vmatprep.subr.mxu0 0.0
      %1975 = vmatpush1.msra.mxu0 0.0
      %1976 = vmatprep.subr.mxu0 0.0
      %1977 = vmatpush1.msra.mxu0 0.0
      %1978 = vmatprep.subr.mxu0 0.0
      %1979 = vmatpush1.msra.mxu0 0.0
      %1980 = vmatprep.subr.mxu0 0.0
      %1981 = vmatpush1.msra.mxu0 0.0
      %1982 = vmatprep.subr.mxu0 0.0
      %1983 = vmatpush1.msra.mxu0 0.0
      %1984 = vmatprep.subr.mxu0 0.0
      %1985 = vmatpush1.msra.mxu0 0.0
      %1986 = vmatprep.subr.mxu0 0.0
      %1987 = vmatpush1.msra.mxu0 0.0
      %1988 = vmatprep.subr.mxu0 0.0
      %1989 = vmatpush1.msra.mxu0 0.0
      %1990 = vmatprep.subr.mxu0 0.0
      %1991 = vmatpush1.msra.mxu0 0.0
      %1992 = vmatprep.subr.mxu0 0.0
      %1993 = vmatpush1.msra.mxu0 0.0
      %1994 = vmatprep.mubr.f32.mxu0 0.0
      %1995 = vmatmul.mubr.f32.gmra.mrb[0].mxu0 %v1914
      %v1996 = vpop.f32.mrb[0].mxu0
      %v1997 = vadd.f32 %v1115, %v1996
      %v1998 = vpop.f32.mrb[0].mxu0
      %v1999 = vadd.f32 %v1117, %v1998
      %2000 = vmatprep.mubr.f32.mxu0 0.0
      %2001 = vmatmul.mubr.f32.gmra.mrb[0].mxu0 %v1915
      %v2002 = vpop.f32.mrb[0].mxu0
      %v2003 = vadd.f32 %v1121, %v2002
      %v2004 = vpop.f32.mrb[0].mxu0
      %v2005 = vadd.f32 %v1123, %v2004
      %2006 = vmatprep.mubr.f32.mxu0 0.0
      %2007 = vmatmul.mubr.f32.gmra.mrb[0].mxu0 %v1916
      %v2008 = vpop.f32.mrb[0].mxu0
      %v2009 = vadd.f32 %v1127, %v2008
      %v2010 = vpop.f32.mrb[0].mxu0
      %v2011 = vadd.f32 %v1129, %v2010
      %2012 = vmatprep.mubr.f32.mxu0 0.0
      %2013 = vmatmul.mubr.f32.gmra.mrb[0].mxu0 %v1917
      %v2014 = vpop.f32.mrb[0].mxu0
      %v2015 = vadd.f32 %v1133, %v2014
      %v2016 = vpop.f32.mrb[0].mxu0
      %v2017 = vadd.f32 %v1135, %v2016
      %2018 = vmatprep.mubr.f32.mxu0 0.0
      %2019 = vmatmul.mubr.f32.gmra.mrb[0].mxu0 %v1918
      %v2020 = vpop.f32.mrb[0].mxu0
      %v2021 = vadd.f32 %v1139, %v2020
      %v2022 = vpop.f32.mrb[0].mxu0
      %v2023 = vadd.f32 %v1141, %v2022
      %2024 = vmatprep.mubr.f32.mxu0 0.0
      %2025 = vmatmul.mubr.f32.gmra.mrb[0].mxu0 %v1919
      %v2026 = vpop.f32.mrb[0].mxu0
      %v2027 = vadd.f32 %v1145, %v2026
      %v2028 = vpop.f32.mrb[0].mxu0
      %v2029 = vadd.f32 %v1147, %v2028
      %2030 = vmatprep.mubr.f32.mxu0 0.0
      %2031 = vmatmul.mubr.f32.gmra.mrb[0].mxu0 %v1920
      %v2032 = vpop.f32.mrb[0].mxu0
      %v2033 = vadd.f32 %v1151, %v2032
      %v2034 = vpop.f32.mrb[0].mxu0
      %v2035 = vadd.f32 %v1153, %v2034
      %2036 = vmatprep.mubr.f32.mxu0 0.0
      %2037 = vmatmul.mubr.f32.gmra.mrb[0].mxu0 %v1921
      %v2038 = vpop.f32.mrb[0].mxu0
      %v2039 = vadd.f32 %v1157, %v2038
      %v2040 = vpop.f32.mrb[0].mxu0
      %v2041 = vadd.f32 %v1159, %v2040
      %2042 = vmatprep.mubr.f32.mxu0 0.0
      %2043 = vmatmul.mubr.f32.gmra.mrb[0].mxu0 %v1922
      %v2044 = vpop.f32.mrb[0].mxu0
      %v2045 = vadd.f32 %v1163, %v2044
      %v2046 = vpop.f32.mrb[0].mxu0
      %v2047 = vadd.f32 %v1165, %v2046
      %2048 = vmatprep.mubr.f32.mxu0 0.0
      %2049 = vmatmul.mubr.f32.gmra.mrb[0].mxu0 %v1923
      %v2050 = vpop.f32.mrb[0].mxu0
      %v2051 = vadd.f32 %v1169, %v2050
      %v2052 = vpop.f32.mrb[0].mxu0
      %v2053 = vadd.f32 %v1171, %v2052
      %2054 = vmatprep.mubr.f32.mxu0 0.0
      %2055 = vmatmul.mubr.f32.gmra.mrb[0].mxu0 %v1924
      %v2056 = vpop.f32.mrb[0].mxu0
      %v2057 = vadd.f32 %v1175, %v2056
      %v2058 = vpop.f32.mrb[0].mxu0
      %v2059 = vadd.f32 %v1177, %v2058
      %2060 = vmatprep.mubr.f32.mxu0 0.0
      %2061 = vmatmul.mubr.f32.gmra.mrb[0].mxu0 %v1925
      %v2062 = vpop.f32.mrb[0].mxu0
      %v2063 = vadd.f32 %v1181, %v2062
      %v2064 = vpop.f32.mrb[0].mxu0
      %v2065 = vadd.f32 %v1183, %v2064
      %2066 = vmatprep.mubr.f32.mxu0 0.0
      %2067 = vmatmul.mubr.f32.gmra.mrb[0].mxu0 %v1926
      %v2068 = vpop.f32.mrb[0].mxu0
      %v2069 = vadd.f32 %v1187, %v2068
      %v2070 = vpop.f32.mrb[0].mxu0
      %v2071 = vadd.f32 %v1189, %v2070
      %2072 = vmatprep.mubr.f32.mxu0 0.0
      %2073 = vmatmul.mubr.f32.gmra.mrb[0].mxu0 %v1927
      %v2074 = vpop.f32.mrb[0].mxu0
      %v2075 = vadd.f32 %v1193, %v2074
      %v2076 = vpop.f32.mrb[0].mxu0
      %v2077 = vadd.f32 %v1195, %v2076
      %2078 = vmatprep.mubr.f32.mxu0 0.0
      %2079 = vmatmul.mubr.f32.gmra.mrb[0].mxu0 %v1928
      %v2080 = vpop.f32.mrb[0].mxu0
      %v2081 = vadd.f32 %v1199, %v2080
      %v2082 = vpop.f32.mrb[0].mxu0
      %v2083 = vadd.f32 %v1201, %v2082
      %2084 = vmatprep.mubr.f32.mxu0 0.0
      %2085 = vmatmul.mubr.f32.gmra.mrb[0].mxu0 %v1929
      %v2086 = vpop.f32.mrb[0].mxu0
      %v2087 = vadd.f32 %v1205, %v2086
      %v2088 = vpop.f32.mrb[0].mxu0
      %v2089 = vadd.f32 %v1207, %v2088
      %2090 = vdwg.mxu0
      %v2091 = vtanh.pop %v1997
      %v2092 = vtanh.pop %v1999
      %v2093 = vtanh.pop %v2003
      %v2094 = vtanh.pop %v2005
      %v2095 = vtanh.pop %v2009
      %v2096 = vtanh.pop %v2011
      %v2097 = vtanh.pop %v2015
      %v2098 = vtanh.pop %v2017
      %v2099 = vtanh.pop %v2021
      %v2100 = vtanh.pop %v2023
      %v2101 = vtanh.pop %v2027
      %v2102 = vtanh.pop %v2029
      %v2103 = vtanh.pop %v2033
      %v2104 = vtanh.pop %v2035
      %v2105 = vtanh.pop %v2039
      %v2106 = vtanh.pop %v2041
      %v2107 = vtanh.pop %v2045
      %v2108 = vtanh.pop %v2047
      %v2109 = vtanh.pop %v2051
      %v2110 = vtanh.pop %v2053
      %v2111 = vtanh.pop %v2057
      %v2112 = vtanh.pop %v2059
      %v2113 = vtanh.pop %v2063
      %v2114 = vtanh.pop %v2065
      %v2115 = vtanh.pop %v2069
      %v2116 = vtanh.pop %v2071
      %v2117 = vtanh.pop %v2075
      %v2118 = vtanh.pop %v2077
      %v2119 = vtanh.pop %v2081
      %v2120 = vtanh.pop %v2083
      %v2121 = vtanh.pop %v2087
      %v2122 = vtanh.pop %v2089
      %v2123 = vsub.f32 1.0, %v1755
      %v2124 = vsub.f32 1.0, %v1757
      %v2125 = vsub.f32 1.0, %v1759
      %v2126 = vsub.f32 1.0, %v1761
      %v2127 = vsub.f32 1.0, %v1763
      %v2128 = vsub.f32 1.0, %v1765
      %v2129 = vsub.f32 1.0, %v1767
      %v2130 = vsub.f32 1.0, %v1769
      %v2131 = vsub.f32 1.0, %v1771
      %v2132 = vsub.f32 1.0, %v1773
      %v2133 = vsub.f32 1.0, %v1775
      %v2134 = vsub.f32 1.0, %v1777
      %v2135 = vsub.f32 1.0, %v1779
      %v2136 = vsub.f32 1.0, %v1781
      %v2137 = vsub.f32 1.0, %v1783
      %v2138 = vsub.f32 1.0, %v1785
      %v2139 = vsub.f32 1.0, %v1787
      %v2140 = vsub.f32 1.0, %v1789
      %v2141 = vsub.f32 1.0, %v1791
      %v2142 = vsub.f32 1.0, %v1793
      %v2143 = vsub.f32 1.0, %v1795
      %v2144 = vsub.f32 1.0, %v1797
      %v2145 = vsub.f32 1.0, %v1799
      %v2146 = vsub.f32 1.0, %v1801
      %v2147 = vsub.f32 1.0, %v1803
      %v2148 = vsub.f32 1.0, %v1805
      %v2149 = vsub.f32 1.0, %v1807
      %v2150 = vsub.f32 1.0, %v1809
      %v2151 = vsub.f32 1.0, %v1811
      %v2152 = vsub.f32 1.0, %v1813
      %v2153 = vsub.f32 1.0, %v1815
      %v2154 = vsub.f32 1.0, %v1817
      %v2155 = vmul.f32 %v2123, %v327
      %v2156 = vmul.f32 %v2124, %v328
      %v2157 = vmul.f32 %v2125, %v329
      %v2158 = vmul.f32 %v2126, %v330
      %v2159 = vmul.f32 %v2127, %v331
      %v2160 = vmul.f32 %v2128, %v332
      %v2161 = vmul.f32 %v2129, %v333
      %v2162 = vmul.f32 %v2130, %v334
      %v2163 = vmul.f32 %v2131, %v335
      %v2164 = vmul.f32 %v2132, %v336
      %v2165 = vmul.f32 %v2133, %v337
      %v2166 = vmul.f32 %v2134, %v338
      %v2167 = vmul.f32 %v2135, %v339
      %v2168 = vmul.f32 %v2136, %v340
      %v2169 = vmul.f32 %v2137, %v341
      %v2170 = vmul.f32 %v2138, %v342
      %v2171 = vmul.f32 %v2139, %v343
      %v2172 = vmul.f32 %v2140, %v344
      %v2173 = vmul.f32 %v2141, %v345
      %v2174 = vmul.f32 %v2142, %v346
      %v2175 = vmul.f32 %v2143, %v347
      %v2176 = vmul.f32 %v2144, %v348
      %v2177 = vmul.f32 %v2145, %v349
      %v2178 = vmul.f32 %v2146, %v350
      %v2179 = vmul.f32 %v2147, %v351
      %v2180 = vmul.f32 %v2148, %v352
      %v2181 = vmul.f32 %v2149, %v353
      %v2182 = vmul.f32 %v2150, %v354
      %v2183 = vmul.f32 %v2151, %v355
      %v2184 = vmul.f32 %v2152, %v356
      %v2185 = vmul.f32 %v2153, %v357
      %v2186 = vmul.f32 %v2154, %v358
      %v2187 = vmul.f32 %v1755, %v2091
      %v2188 = vmul.f32 %v1757, %v2092
      %v2189 = vmul.f32 %v1759, %v2093
      %v2190 = vmul.f32 %v1761, %v2094
      %v2191 = vmul.f32 %v1763, %v2095
      %v2192 = vmul.f32 %v1765, %v2096
      %v2193 = vmul.f32 %v1767, %v2097
      %v2194 = vmul.f32 %v1769, %v2098
      %v2195 = vmul.f32 %v1771, %v2099
      %v2196 = vmul.f32 %v1773, %v2100
      %v2197 = vmul.f32 %v1775, %v2101
      %v2198 = vmul.f32 %v1777, %v2102
      %v2199 = vmul.f32 %v1779, %v2103
      %v2200 = vmul.f32 %v1781, %v2104
      %v2201 = vmul.f32 %v1783, %v2105
      %v2202 = vmul.f32 %v1785, %v2106
      %v2203 = vmul.f32 %v1787, %v2107
      %v2204 = vmul.f32 %v1789, %v2108
      %v2205 = vmul.f32 %v1791, %v2109
      %v2206 = vmul.f32 %v1793, %v2110
      %v2207 = vmul.f32 %v1795, %v2111
      %v2208 = vmul.f32 %v1797, %v2112
      %v2209 = vmul.f32 %v1799, %v2113
      %v2210 = vmul.f32 %v1801, %v2114
      %v2211 = vmul.f32 %v1803, %v2115
      %v2212 = vmul.f32 %v1805, %v2116
      %v2213 = vmul.f32 %v1807, %v2117
      %v2214 = vmul.f32 %v1809, %v2118
      %v2215 = vmul.f32 %v1811, %v2119
      %v2216 = vmul.f32 %v1813, %v2120
      %v2217 = vmul.f32 %v1815, %v2121
      %v2218 = vmul.f32 %v1817, %v2122
      %v2219 = vadd.f32 %v2155, %v2187
      %v2220 = vadd.f32 %v2156, %v2188
      %v2221 = vadd.f32 %v2157, %v2189
      %v2222 = vadd.f32 %v2158, %v2190
      %v2223 = vadd.f32 %v2159, %v2191
      %v2224 = vadd.f32 %v2160, %v2192
      %v2225 = vadd.f32 %v2161, %v2193
      %v2226 = vadd.f32 %v2162, %v2194
      %v2227 = vadd.f32 %v2163, %v2195
      %v2228 = vadd.f32 %v2164, %v2196
      %v2229 = vadd.f32 %v2165, %v2197
      %v2230 = vadd.f32 %v2166, %v2198
      %v2231 = vadd.f32 %v2167, %v2199
      %v2232 = vadd.f32 %v2168, %v2200
      %v2233 = vadd.f32 %v2169, %v2201
      %v2234 = vadd.f32 %v2170, %v2202
      %v2235 = vadd.f32 %v2171, %v2203
      %v2236 = vadd.f32 %v2172, %v2204
      %v2237 = vadd.f32 %v2173, %v2205
      %v2238 = vadd.f32 %v2174, %v2206
      %v2239 = vadd.f32 %v2175, %v2207
      %v2240 = vadd.f32 %v2176, %v2208
      %v2241 = vadd.f32 %v2177, %v2209
      %v2242 = vadd.f32 %v2178, %v2210
      %v2243 = vadd.f32 %v2179, %v2211
      %v2244 = vadd.f32 %v2180, %v2212
      %v2245 = vadd.f32 %v2181, %v2213
      %v2246 = vadd.f32 %v2182, %v2214
      %v2247 = vadd.f32 %v2183, %v2215
      %v2248 = vadd.f32 %v2184, %v2216
      %v2249 = vadd.f32 %v2185, %v2217
      %v2250 = vadd.f32 %v2186, %v2218
      %2251 = vst [vmem:[%s325] sm:$0xff] %v2219
      %2252 = vst [vmem:[%s325 + $0x8] sm:$0xff] %v2220
      %2253 = vst [vmem:[%s325 + $0x10] sm:$0xff] %v2221
      %2254 = vst [vmem:[%s325 + $0x18] sm:$0xff] %v2222
      %2255 = vst [vmem:[%s325 + $0x20] sm:$0xff] %v2223
      %2256 = vst [vmem:[%s325 + $0x28] sm:$0xff] %v2224
      %2257 = vst [vmem:[%s325 + $0x30] sm:$0xff] %v2225
      %2258 = vst [vmem:[%s325 + $0x38] sm:$0xff] %v2226
      %2259 = vst [vmem:[%s325 + $0x40] sm:$0xff] %v2227
      %2260 = vst [vmem:[%s325 + $0x48] sm:$0xff] %v2228
      %2261 = vst [vmem:[%s325 + $0x50] sm:$0xff] %v2229
      %2262 = vst [vmem:[%s325 + $0x58] sm:$0xff] %v2230
      %2263 = vst [vmem:[%s325 + $0x60] sm:$0xff] %v2231
      %2264 = vst [vmem:[%s325 + $0x68] sm:$0xff] %v2232
      %2265 = vst [vmem:[%s325 + $0x70] sm:$0xff] %v2233
      %2266 = vst [vmem:[%s325 + $0x78] sm:$0xff] %v2234
      %2267 = vst [vmem:[%s325 + $0x80] sm:$0xff] %v2235
      %2268 = vst [vmem:[%s325 + $0x88] sm:$0xff] %v2236
      %2269 = vst [vmem:[%s325 + $0x90] sm:$0xff] %v2237
      %2270 = vst [vmem:[%s325 + $0x98] sm:$0xff] %v2238
      %2271 = vst [vmem:[%s325 + $0xa0] sm:$0xff] %v2239
      %2272 = vst [vmem:[%s325 + $0xa8] sm:$0xff] %v2240
      %2273 = vst [vmem:[%s325 + $0xb0] sm:$0xff] %v2241
      %2274 = vst [vmem:[%s325 + $0xb8] sm:$0xff] %v2242
      %2275 = vst [vmem:[%s325 + $0xc0] sm:$0xff] %v2243
      %2276 = vst [vmem:[%s325 + $0xc8] sm:$0xff] %v2244
      %2277 = vst [vmem:[%s325 + $0xd0] sm:$0xff] %v2245
      %2278 = vst [vmem:[%s325 + $0xd8] sm:$0xff] %v2246
      %2279 = vst [vmem:[%s325 + $0xe0] sm:$0xff] %v2247
      %2280 = vst [vmem:[%s325 + $0xe8] sm:$0xff] %v2248
      %2281 = vst [vmem:[%s325 + $0xf0] sm:$0xff] %v2249
      %2282 = vst [vmem:[%s325 + $0xf8] sm:$0xff] %v2250
      %s2283 = smul.u32 2, %s22
      %p2284 = scmp.lt.s32.totalorder %s21, 1
      %s2285 = scalar_select %p2284, %s21, 1
      %p2286 = scmp.lt.s32.totalorder %s2283, 1
      %s2287 = scalar_select %p2286, %s2283, 1
      %s2288 = smul.addr %s2285, 32
      %s2289 = sadd.s32 %s2287, %s2288
      %s2290 = smul.addr %s2289, 8
      %s2291 = scalar_lea.vmem %s6, %s2290
      // Predicated region
      $region45: #{_lambda_.1} parent=43 // pred_check
        %p2292 = pneg %p189
      $region46: #{_lambda_.1} parent=43 // pred_check_branch
        %2294 = sbr.rel (%p2292) target = $region48
      $region47: #{_lambda_.1} parent=43 // pred_region
        %s2295 = smul.u32 2, %s22
      $region48: #{_lambda_.1} parent=43 // pred_fallthru
        _
    $region44: #{_lambda_.1} parent=5 // pred_fallthru
      _
    %p2296 = scmp.le.s32.totalorder 2, %s12
    // Predicated region
    $region49: #{_lambda_.1} parent=5 // pred_check
      %p2297 = pneg %p2296
    $region50: #{_lambda_.1} parent=5 // pred_check_branch
      %2299 = sbr.rel (%p2297) target = $region52
    $region51: #{_lambda_.1} parent=5 // pred_region
      %s2300 = ssub.s32 %s12, 2
      // Predicated region
      $region53: #{_lambda_.1} parent=51 // pred_check
        %p2301 = pneg %p195
      $region54: #{_lambda_.1} parent=51 // pred_check_branch
        %2303 = sbr.rel (%p2301) target = $region56
      $region55: #{_lambda_.1} parent=51 // pred_region
        %s2304 = smul.u32 2, %s24
        %p2305 = scmp.lt.s32.totalorder %s23, 1
        %s2306 = scalar_select %p2305, %s23, 1
        %p2307 = scmp.lt.s32.totalorder %s2304, 1
        %s2308 = scalar_select %p2307, %s2304, 1
        %s2309 = smul.addr %s2306, 32
        %s2310 = sadd.s32 %s2308, %s2309
        %s2311 = smul.addr %s2310, 8
        %s2312 = scalar_lea.vmem %s6, %s2311
      $region56: #{_lambda_.1} parent=51 // pred_fallthru
        _
    $region52: #{_lambda_.1} parent=5 // pred_fallthru
      _
  $region6: #{_lambda_.1} parent=0 // loop_footer
    %s16 = sadd.s32 1, %s12
  $region7: #{_lambda_.1} parent=0 // loop_footer_branch
    %11 = sbr.rel target = $region3
  $region8: #{_lambda_.1} parent=0 // loop_exit
    _

</llo_original>
